<compile_context>
chip_gen: v5e
topology: v5e:2x2
jax: 0.10.0
libtpu: 0.0.40
codegen_flags: <defaults>
</compile_context>

<pallas_src>
import functools

import jax
import jax.numpy as jnp
from jax.experimental import pallas as pl
from jax.experimental.pallas import tpu as pltpu


_NEG_SLOPE = 0.2

# Toggle: request single-buffering (pl.Buffered(1)) for grid-invariant operands.
# Flipped off at runtime (and the call retried) if this jax version rejects it.
_SINGLE_BUFFER_OK = [True]


# --------------------------- VMEM budget helpers ---------------------------- #

@functools.lru_cache(maxsize=None)
def _vmem_limit_bytes():
    """Per-generation scoped-VMEM limit: ~75% of physical VMEM, capped at
    100 MiB (v5e/v6e have 128 MiB per core, v7x has 64 MiB per TensorCore)."""
    cap = None
    try:
        cap = getattr(pltpu.get_tpu_info(), "vmem_capacity_bytes", None)
    except Exception:
        cap = None
    if not cap:
        cap = 64 * 1024 * 1024            # conservative default (v7x per-TC)
    return int(min(cap * 3 // 4, 100 * 1024 * 1024))


def _tile_budget_bytes():
    # Leave headroom under the scoped limit for compiler scratch / spills.
    return int(_vmem_limit_bytes() * 0.6)


def _choose_row_tile(h_out, wp2, k4, n_out, out_bytes, n_batch, budget):
    """Largest divisor of h_out whose per-step VMEM footprint fits the budget;
    when batch == 1, keep >= 2 grid steps so both v7x TensorCores get work."""
    w_out = wp2 - 1

    def est(th):
        x_blk = th * wp2 * k4 * 2            # bf16 main input block
        halo = wp2 * k4 * 2                  # bf16 halo row
        o_blk = th * w_out * n_out * out_bytes
        patch = th * w_out * 4 * k4 * 2      # in-VMEM patch matrix (bf16)
        acc = th * w_out * n_out * 4         # f32 accumulator
        w_res = 4 * k4 * n_out * 2           # resident weight
        return 2 * (x_blk + halo + o_blk) + patch + acc + w_res

    divisors = [d for d in range(1, h_out + 1) if h_out % d == 0]
    fitting = [d for d in divisors if est(d) <= budget] or [1]
    th = max(fitting)
    if n_batch == 1 and h_out // th < 2:
        smaller = [d for d in fitting if h_out // d >= 2]
        if smaller:
            th = max(smaller)
    return th


# ------------------------------ Pallas kernel ------------------------------- #

def _block_kernel(x_ref, halo_ref, w_ref, b_ref, *rest, negative_slope,
                  has_final):
    """One DCGAN block on one (batch, row-tile) grid cell.

    The 4x4/stride-2 conv was rewritten (wrapper-side space-to-depth) as a
    2x2/stride-1 conv over a (th+1, Wp2, 4*Cin) window.  The im2col for its 4
    taps is built here in VMEM (no HBM patch matrix), giving a single MXU
    matmul with contraction depth 16*Cin, then f32 bias + LeakyReLU.  When
    has_final, the module's 1x1 `final` conv is applied to the resident tile
    as a second matmul before the single store.
    """
    if has_final:
        wf_ref, bf_ref, o_ref = rest
    else:
        (o_ref,) = rest

    th = x_ref.shape[1]
    wp2 = x_ref.shape[2]
    k4 = x_ref.shape[3]
    w_out = wp2 - 1
    n_out = o_ref.shape[3]

    xc = jnp.concatenate([x_ref[0], halo_ref[0]], axis=0)     # (th+1, Wp2, K4)
    taps = [xc[p:p + th, q:q + w_out, :].reshape(th * w_out, k4)
            for p in range(2) for q in range(2)]
    patch = jnp.concatenate(taps, axis=-1)                    # (M, 16*Cin) bf16

    acc = jnp.dot(patch, w_ref[...], preferred_element_type=jnp.float32)
    acc = acc + b_ref[...]                                    # (1, C_out) bcast
    acc = jnp.where(acc >= 0.0, acc, negative_slope * acc)    # LeakyReLU (f32)

    if has_final:
        acc = jnp.dot(acc.astype(wf_ref.dtype), wf_ref[...],
                      preferred_element_type=jnp.float32) + bf_ref[...]

    o_ref[0] = acc.reshape(th, w_out, n_out).astype(o_ref.dtype)


# -------------------------- per-layer wrapper (JAX) -------------------------- #

def _prep_block_weight(w_oihw):
    """(C_out, C_in, 4, 4) -> (16*C_in, C_out) bf16, ordered to match the
    in-kernel patch layout: index = (2p+q)*4C + dh*2C + dw*C + c with
    (kh, kw) = (2p+dh, 2q+dw)."""
    c_out, c_in, kh, kw = w_oihw.shape
    assert kh == 4 and kw == 4, "DCGAN block conv must be 4x4"
    w = w_oihw.reshape(c_out, c_in, 2, 2, 2, 2)        # (co, c, p, dh, q, dw)
    w = jnp.transpose(w, (2, 4, 3, 5, 1, 0))           # (p, q, dh, dw, c, co)
    return w.reshape(16 * c_in, c_out).astype(jnp.bfloat16)


def _space_to_depth_pad(x_nhwc):
    """pad=1 + space-to-depth(2): (N, H, W, C) -> (N, H/2+1, W/2+1, 4C) bf16.
    A single ~1x-activation copy replacing the 4x im2col materialization; the
    4x4/stride-2 conv becomes a 2x2/stride-1 conv on this tensor."""
    n, h, w, c = x_nhwc.shape
    assert h % 2 == 0 and w % 2 == 0, "DCGAN spatial dims must be even"
    hp2, wp2 = h // 2 + 1, w // 2 + 1
    xp = jnp.pad(x_nhwc, ((0, 0), (1, 1), (1, 1), (0, 0)))
    xs = xp.reshape(n, hp2, 2, wp2, 2, c)
    xs = jnp.transpose(xs, (0, 1, 3, 2, 4, 5)).reshape(n, hp2, wp2, 4 * c)
    # TODO(synk): this pad+s2d copy could also be folded into the kernel with
    # halo DMAs from a pl.ANY ref, removing the last wrapper-side glue pass.
    return xs.astype(jnp.bfloat16)


def _conv_block(x_nhwc, w_oihw, b, *, final=None, out_dtype=jnp.bfloat16):
    """Conv2d(k=4, s=2, p=1) + LeakyReLU(0.2), optionally fused with the 1x1
    `final` conv.  x_nhwc: (N, H, W, C_in)."""
    n, h, w_dim, c_in = x_nhwc.shape
    c_out = w_oihw.shape[0]
    h_out, w_out = h // 2, w_dim // 2
    hp2, wp2 = h_out + 1, w_out + 1
    k4 = 4 * c_in

    xs2d = _space_to_depth_pad(x_nhwc)                        # (N, Hp2, Wp2, 4C)
    w_mat = _prep_block_weight(w_oihw)                        # (16C, C_out)
    b_vec = b.astype(jnp.float32).reshape(1, c_out)

    has_final = final is not None
    if has_final:
        wf, bf = final                                        # (F, C_out, 1, 1)
        f_out = wf.shape[0]
        wf_mat = wf.reshape(f_out, c_out).T.astype(jnp.bfloat16)   # (C_out, F)
        bf_vec = bf.astype(jnp.float32).reshape(1, f_out)
        n_out = f_out
        out_dtype = jnp.float32
    else:
        n_out = c_out

    out_bytes = jnp.dtype(out_dtype).itemsize
    th = _choose_row_tile(h_out, wp2, k4, n_out, out_bytes, n,
                          _tile_budget_bytes())
    grid = (n, h_out // th)

    kern = functools.partial(_block_kernel, negative_slope=float(_NEG_SLOPE),
                             has_final=has_final)

    flops = 2 * n * h_out * w_out * (16 * c_in) * c_out
    bytes_accessed = (xs2d.size * 2 + w_mat.size * 2 + b_vec.size * 4
                      + n * h_out * w_out * n_out * out_bytes)
    if has_final:
        flops += 2 * n * h_out * w_out * c_out * n_out
        bytes_accessed += wf_mat.size * 2 + bf_vec.size * 4

    def run(single_buffer_resident):
        res_kw = ({"pipeline_mode": pl.Buffered(1)}
                  if single_buffer_resident else {})
        in_specs = [
            # main row window: output rows [r*th, (r+1)*th)
            pl.BlockSpec((1, th, wp2, k4), lambda ni, r: (ni, r, 0, 0)),
            # one-row halo just below the main window
            pl.BlockSpec((1, 1, wp2, k4),
                         lambda ni, r: (ni, (r + 1) * th, 0, 0)),
            # grid-invariant (resident) operands
            pl.BlockSpec((16 * c_in, c_out), lambda ni, r: (0, 0), **res_kw),
            pl.BlockSpec((1, c_out), lambda ni, r: (0, 0), **res_kw),
        ]
        args = [xs2d, xs2d, w_mat, b_vec]
        if has_final:
            in_specs += [
                pl.BlockSpec((c_out, n_out), lambda ni, r: (0, 0), **res_kw),
                pl.BlockSpec((1, n_out), lambda ni, r: (0, 0), **res_kw),
            ]
            args += [wf_mat, bf_vec]
        return pl.pallas_call(
            kern,
            out_shape=jax.ShapeDtypeStruct((n, h_out, w_out, n_out), out_dtype),
            grid=grid,
            in_specs=in_specs,
            out_specs=pl.BlockSpec((1, th, w_out, n_out),
                                   lambda ni, r: (ni, r, 0, 0)),
            compiler_params=pltpu.CompilerParams(
                dimension_semantics=("parallel", "parallel"),
                vmem_limit_bytes=_vmem_limit_bytes()),
            cost_estimate=pl.CostEstimate(flops=int(flops), transcendentals=0,
                                          bytes_accessed=int(bytes_accessed)),
        )(*args)

    if _SINGLE_BUFFER_OK[0]:
        try:
            return run(True)
        except Exception:
            _SINGLE_BUFFER_OK[0] = False    # pl.Buffered(1) unsupported: retry
    return run(False)


def dcgan_base_forward(x_nchw, params):
    """Equivalent of DCGANBase.forward: blocks of Conv2d(4,2,1)+LeakyReLU(0.2)
    followed by the optional 1x1 `final` conv (fused into the last block's
    kernel).  Input/output are NCHW."""
    blocks = params["blocks"]
    final = params["final"]
    x = jnp.transpose(x_nchw, (0, 2, 3, 1))                   # NCHW -> NHWC
    n_blocks = len(blocks)
    for li, (w, b) in enumerate(blocks):
        is_last = li == n_blocks - 1
        if is_last and final is not None:
            out = _conv_block(x, w, b, final=final)           # fused 1x1, f32
            return jnp.transpose(out, (0, 3, 1, 2))
        out_dtype = jnp.float32 if is_last else jnp.bfloat16
        x = _conv_block(x, w, b, out_dtype=out_dtype)
    return jnp.transpose(x.astype(jnp.float32), (0, 3, 1, 2))


# ------------------------------- reference ---------------------------------- #

def _reference_forward(x_nchw, params):
    """Pure-JAX (lax.conv) reference, matched to the kernel's precision path
    (bf16 conv inputs, f32 accumulation, bf16 inter-layer storage)."""
    def conv(x, w, stride, pad):
        dn = jax.lax.conv_dimension_numbers(x.shape, w.shape,
                                            ("NCHW", "OIHW", "NCHW"))
        return jax.lax.conv_general_dilated(
            x.astype(jnp.bfloat16), w.astype(jnp.bfloat16),
            (stride, stride), ((pad, pad), (pad, pad)),
            dimension_numbers=dn, preferred_element_type=jnp.float32)

    x = x_nchw
    for (w, b) in params["blocks"]:
        y = conv(x, w, 2, 1) + b.reshape(1, -1, 1, 1)
        y = jnp.where(y >= 0.0, y, 0.2 * y)
        x = y.astype(jnp.bfloat16).astype(jnp.float32)        # kernel stores bf16
    if params["final"] is not None:
        wf, bf = params["final"]
        x = conv(x, wf, 1, 0) + bf.reshape(1, -1, 1, 1)
    return x


# --------------------------------- demo ------------------------------------- #

if __name__ == "__main__":
    key = jax.random.PRNGKey(0)

    # Small, module-consistent configuration.
    input_dim = 4
    output_dim = 3
    block_config = [8, 16]
    N, H, W = 2, 16, 16

    channels = [input_dim] + block_config
    n_keys = 2 * len(block_config) + 3
    keys = jax.random.split(key, n_keys)

    # Deterministic parameter init (shapes follow nn.Conv2d in __init__).
    blocks = []
    k = 0
    for cin, cout in zip(channels[:-1], channels[1:]):
        w = 0.05 * jax.random.normal(keys[k], (cout, cin, 4, 4), jnp.float32); k += 1
        b = 0.01 * jax.random.normal(keys[k], (cout,), jnp.float32); k += 1
        blocks.append((w, b))
    wf = 0.05 * jax.random.normal(keys[k], (output_dim, channels[-1], 1, 1),
                                  jnp.float32); k += 1
    bf = 0.01 * jax.random.normal(keys[k], (output_dim,), jnp.float32); k += 1
    params = {"blocks": blocks, "final": (wf, bf)}

    x = jax.random.normal(keys[k], (N, input_dim, H, W), jnp.float32)

    out = dcgan_base_forward(x, params)
    out = jax.block_until_ready(out)

    # Sanity: shape (N, output_dim, H/4, W/4) and match the lax.conv reference.
    assert out.shape == (N, output_dim, H // 4, W // 4), out.shape
    ref = jax.block_until_ready(_reference_forward(x, params))
    assert jnp.allclose(out, ref, atol=2e-3, rtol=2e-3), \
        float(jnp.max(jnp.abs(out - ref)))

    print("KERNEL_OK")
</pallas_src>

<mosaic_0001>
module attributes {stable_mosaic.version = 11 : i64} {
  func.func @_block_kernel(%arg0: i32, %arg1: i32, %arg2: memref<1x8x9x16xbf16, #tpu.memory_space<vmem>>, %arg3: memref<1x1x9x16xbf16, #tpu.memory_space<vmem>>, %arg4: memref<64x8xbf16, #tpu.memory_space<vmem>>, %arg5: memref<1x8xf32, #tpu.memory_space<vmem>>, %arg6: memref<1x8x8x8xbf16, #tpu.memory_space<vmem>>) attributes {dimension_semantics = [#tpu.dimension_semantics<parallel>, #tpu.dimension_semantics<parallel>], iteration_bounds = array<i64: 2, 1>, scalar_prefetch = 0 : i64, scratch_operands = 0 : i64, tpu.core_type = #tpu.core_type<tc>, window_params = [{transform_indices = @transform_0, window_bounds = array<i64: 1, 8, 9, 16>}, {transform_indices = @transform_1, window_bounds = array<i64: 1, 1, 9, 16>}, {pipeline_mode = #tpu.pipeline_mode<synchronous>, transform_indices = @transform_2, window_bounds = array<i64: 64, 8>}, {pipeline_mode = #tpu.pipeline_mode<synchronous>, transform_indices = @transform_3, window_bounds = array<i64: 1, 8>}, {transform_indices = @transform_4, window_bounds = array<i64: 1, 8, 8, 8>}]} {
    %c0 = arith.constant 0 : index
    %c0_0 = arith.constant 0 : index
    %c0_1 = arith.constant 0 : index
    %c0_2 = arith.constant 0 : index
    %0 = vector.load %arg2[%c0, %c0_0, %c0_1, %c0_2] : memref<1x8x9x16xbf16, #tpu.memory_space<vmem>>, vector<1x8x9x16xbf16>
    %1 = vector.shape_cast %0 : vector<1x8x9x16xbf16> to vector<8x9x16xbf16>
    %c0_3 = arith.constant 0 : index
    %c0_4 = arith.constant 0 : index
    %c0_5 = arith.constant 0 : index
    %c0_6 = arith.constant 0 : index
    %2 = vector.load %arg3[%c0_3, %c0_4, %c0_5, %c0_6] : memref<1x1x9x16xbf16, #tpu.memory_space<vmem>>, vector<1x1x9x16xbf16>
    %3 = vector.shape_cast %2 : vector<1x1x9x16xbf16> to vector<1x9x16xbf16>
    %4 = tpu.concatenate %1, %3 in 0 : vector<8x9x16xbf16>, vector<1x9x16xbf16> -> vector<9x9x16xbf16>
    %5 = vector.extract_strided_slice %4 {offsets = [0, 0, 0], sizes = [8, 8, 16], strides = [1, 1, 1]} : vector<9x9x16xbf16> to vector<8x8x16xbf16>
    %6 = vector.shape_cast %5 : vector<8x8x16xbf16> to vector<64x16xbf16>
    %7 = vector.extract_strided_slice %4 {offsets = [0, 1, 0], sizes = [8, 8, 16], strides = [1, 1, 1]} : vector<9x9x16xbf16> to vector<8x8x16xbf16>
    %8 = vector.shape_cast %7 : vector<8x8x16xbf16> to vector<64x16xbf16>
    %9 = vector.extract_strided_slice %4 {offsets = [1, 0, 0], sizes = [8, 8, 16], strides = [1, 1, 1]} : vector<9x9x16xbf16> to vector<8x8x16xbf16>
    %10 = vector.shape_cast %9 : vector<8x8x16xbf16> to vector<64x16xbf16>
    %11 = vector.extract_strided_slice %4 {offsets = [1, 1, 0], sizes = [8, 8, 16], strides = [1, 1, 1]} : vector<9x9x16xbf16> to vector<8x8x16xbf16>
    %12 = vector.shape_cast %11 : vector<8x8x16xbf16> to vector<64x16xbf16>
    %13 = tpu.concatenate %6, %8, %10, %12 in 1 : vector<64x16xbf16>, vector<64x16xbf16>, vector<64x16xbf16>, vector<64x16xbf16> -> vector<64x64xbf16>
    %c0_7 = arith.constant 0 : index
    %c0_8 = arith.constant 0 : index
    %14 = vector.load %arg4[%c0_7, %c0_8] : memref<64x8xbf16, #tpu.memory_space<vmem>>, vector<64x8xbf16>
    %cst = arith.constant dense<0.000000e+00> : vector<64x8xf32>
    %15 = tpu.matmul %13, %14, %cst {dimension_numbers = #tpu.dot_dimension_numbers<[1], [0], [0], [1], [0, 0, 1, 1], [], []>} : vector<64x64xbf16>, vector<64x8xbf16>, vector<64x8xf32> -> vector<64x8xf32>
    %c0_9 = arith.constant 0 : index
    %c0_10 = arith.constant 0 : index
    %16 = vector.load %arg5[%c0_9, %c0_10] : memref<1x8xf32, #tpu.memory_space<vmem>>, vector<1x8xf32>
    %17 = vector.broadcast %16 : vector<1x8xf32> to vector<64x8xf32>
    %18 = arith.addf %15, %17 : vector<64x8xf32>
    %cst_11 = arith.constant 0.000000e+00 : f32
    %19 = vector.broadcast %cst_11 : f32 to vector<64x8xf32>
    %20 = arith.cmpf oge, %18, %19 : vector<64x8xf32>
    %cst_12 = arith.constant 2.000000e-01 : f32
    %21 = vector.broadcast %cst_12 : f32 to vector<64x8xf32>
    %22 = arith.mulf %21, %18 : vector<64x8xf32>
    %23 = arith.select %20, %18, %22 : vector<64x8xi1>, vector<64x8xf32>
    %24 = vector.shape_cast %23 : vector<64x8xf32> to vector<8x8x8xf32>
    %25 = arith.truncf %24 : vector<8x8x8xf32> to vector<8x8x8xbf16>
    %c0_13 = arith.constant 0 : index
    %c0_14 = arith.constant 0 : index
    %c0_15 = arith.constant 0 : index
    %c0_16 = arith.constant 0 : index
    %26 = vector.load %arg6[%c0_13, %c0_14, %c0_15, %c0_16] : memref<1x8x8x8xbf16, #tpu.memory_space<vmem>>, vector<1x8x8x8xbf16>
    %27 = vector.shape_cast %26 : vector<1x8x8x8xbf16> to vector<8x8x8xbf16>
    %28 = vector.shape_cast %25 : vector<8x8x8xbf16> to vector<1x8x8x8xbf16>
    tpu.vector_store %arg6[%c0_13, %c0_14, %c0_15, %c0_16], %28 {strides = array<i32>} : memref<1x8x8x8xbf16, #tpu.memory_space<vmem>>, vector<1x8x8x8xbf16>,
    return
  }
  func.func @transform_0(%arg0: i32, %arg1: i32) -> (i32, i32, i32, i32) {
    %c0_i32 = arith.constant 0 : i32
    %c0_i32_0 = arith.constant 0 : i32
    %c0_i32_1 = arith.constant 0 : i32
    return %arg0, %arg1, %c0_i32, %c0_i32_0 : i32, i32, i32, i32
  }
  func.func @transform_1(%arg0: i32, %arg1: i32) -> (i32, i32, i32, i32) {
    %c1_i32 = arith.constant 1 : i32
    %0 = arith.addi %arg1, %c1_i32 : i32
    %c8_i32 = arith.constant 8 : i32
    %1 = arith.muli %0, %c8_i32 : i32
    %c0_i32 = arith.constant 0 : i32
    %c0_i32_0 = arith.constant 0 : i32
    %c0_i32_1 = arith.constant 0 : i32
    return %arg0, %1, %c0_i32, %c0_i32_0 : i32, i32, i32, i32
  }
  func.func @transform_2(%arg0: i32, %arg1: i32) -> (i32, i32) {
    %c0_i32 = arith.constant 0 : i32
    %c0_i32_0 = arith.constant 0 : i32
    %c0_i32_1 = arith.constant 0 : i32
    return %c0_i32, %c0_i32_0 : i32, i32
  }
  func.func @transform_3(%arg0: i32, %arg1: i32) -> (i32, i32) {
    %c0_i32 = arith.constant 0 : i32
    %c0_i32_0 = arith.constant 0 : i32
    %c0_i32_1 = arith.constant 0 : i32
    return %c0_i32, %c0_i32_0 : i32, i32
  }
  func.func @transform_4(%arg0: i32, %arg1: i32) -> (i32, i32, i32, i32) {
    %c0_i32 = arith.constant 0 : i32
    %c0_i32_0 = arith.constant 0 : i32
    %c0_i32_1 = arith.constant 0 : i32
    return %arg0, %arg1, %c0_i32, %c0_i32_0 : i32, i32, i32, i32
  }
}

module attributes {stable_mosaic.version = 11 : i64} {
  func.func @_block_kernel(%arg0: i32, %arg1: i32, %arg2: memref<1x8x9x16xbf16, #tpu.memory_space<vmem>>, %arg3: memref<1x1x9x16xbf16, #tpu.memory_space<vmem>>, %arg4: memref<64x8xbf16, #tpu.memory_space<vmem>>, %arg5: memref<1x8xf32, #tpu.memory_space<vmem>>, %arg6: memref<1x8x8x8xbf16, #tpu.memory_space<vmem>>) attributes {dimension_semantics = [#tpu.dimension_semantics<parallel>, #tpu.dimension_semantics<parallel>], iteration_bounds = array<i64: 2, 1>, scalar_prefetch = 0 : i64, scratch_operands = 0 : i64, tpu.core_type = #tpu.core_type<tc>, window_params = [{transform_indices = @transform_0, window_bounds = array<i64: 1, 8, 9, 16>}, {transform_indices = @transform_1, window_bounds = array<i64: 1, 1, 9, 16>}, {pipeline_mode = #tpu.pipeline_mode<synchronous>, transform_indices = @transform_2, window_bounds = array<i64: 64, 8>}, {pipeline_mode = #tpu.pipeline_mode<synchronous>, transform_indices = @transform_3, window_bounds = array<i64: 1, 8>}, {transform_indices = @transform_4, window_bounds = array<i64: 1, 8, 8, 8>}]} {
    %c0 = arith.constant 0 : index
    %c0_0 = arith.constant 0 : index
    %c0_1 = arith.constant 0 : index
    %c0_2 = arith.constant 0 : index
    %0 = vector.load %arg2[%c0, %c0_0, %c0_1, %c0_2] : memref<1x8x9x16xbf16, #tpu.memory_space<vmem>>, vector<1x8x9x16xbf16>
    %1 = vector.shape_cast %0 : vector<1x8x9x16xbf16> to vector<8x9x16xbf16>
    %c0_3 = arith.constant 0 : index
    %c0_4 = arith.constant 0 : index
    %c0_5 = arith.constant 0 : index
    %c0_6 = arith.constant 0 : index
    %2 = vector.load %arg3[%c0_3, %c0_4, %c0_5, %c0_6] : memref<1x1x9x16xbf16, #tpu.memory_space<vmem>>, vector<1x1x9x16xbf16>
    %3 = vector.shape_cast %2 : vector<1x1x9x16xbf16> to vector<1x9x16xbf16>
    %4 = tpu.concatenate %1, %3 in 0 : vector<8x9x16xbf16>, vector<1x9x16xbf16> -> vector<9x9x16xbf16>
    %5 = vector.extract_strided_slice %4 {offsets = [0, 0, 0], sizes = [8, 8, 16], strides = [1, 1, 1]} : vector<9x9x16xbf16> to vector<8x8x16xbf16>
    %6 = vector.shape_cast %5 : vector<8x8x16xbf16> to vector<64x16xbf16>
    %7 = vector.extract_strided_slice %4 {offsets = [0, 1, 0], sizes = [8, 8, 16], strides = [1, 1, 1]} : vector<9x9x16xbf16> to vector<8x8x16xbf16>
    %8 = vector.shape_cast %7 : vector<8x8x16xbf16> to vector<64x16xbf16>
    %9 = vector.extract_strided_slice %4 {offsets = [1, 0, 0], sizes = [8, 8, 16], strides = [1, 1, 1]} : vector<9x9x16xbf16> to vector<8x8x16xbf16>
    %10 = vector.shape_cast %9 : vector<8x8x16xbf16> to vector<64x16xbf16>
    %11 = vector.extract_strided_slice %4 {offsets = [1, 1, 0], sizes = [8, 8, 16], strides = [1, 1, 1]} : vector<9x9x16xbf16> to vector<8x8x16xbf16>
    %12 = vector.shape_cast %11 : vector<8x8x16xbf16> to vector<64x16xbf16>
    %13 = tpu.concatenate %6, %8, %10, %12 in 1 : vector<64x16xbf16>, vector<64x16xbf16>, vector<64x16xbf16>, vector<64x16xbf16> -> vector<64x64xbf16>
    %c0_7 = arith.constant 0 : index
    %c0_8 = arith.constant 0 : index
    %14 = vector.load %arg4[%c0_7, %c0_8] : memref<64x8xbf16, #tpu.memory_space<vmem>>, vector<64x8xbf16>
    %cst = arith.constant dense<0.000000e+00> : vector<64x8xf32>
    %15 = tpu.matmul %13, %14, %cst {dimension_numbers = #tpu.dot_dimension_numbers<[1], [0], [0], [1], [0, 0, 1, 1], [], []>} : vector<64x64xbf16>, vector<64x8xbf16>, vector<64x8xf32> -> vector<64x8xf32>
    %c0_9 = arith.constant 0 : index
    %c0_10 = arith.constant 0 : index
    %16 = vector.load %arg5[%c0_9, %c0_10] : memref<1x8xf32, #tpu.memory_space<vmem>>, vector<1x8xf32>
    %17 = vector.broadcast %16 : vector<1x8xf32> to vector<64x8xf32>
    %18 = arith.addf %15, %17 : vector<64x8xf32>
    %cst_11 = arith.constant 0.000000e+00 : f32
    %19 = vector.broadcast %cst_11 : f32 to vector<64x8xf32>
    %20 = arith.cmpf oge, %18, %19 : vector<64x8xf32>
    %cst_12 = arith.constant 2.000000e-01 : f32
    %21 = vector.broadcast %cst_12 : f32 to vector<64x8xf32>
    %22 = arith.mulf %21, %18 : vector<64x8xf32>
    %23 = arith.select %20, %18, %22 : vector<64x8xi1>, vector<64x8xf32>
    %24 = vector.shape_cast %23 : vector<64x8xf32> to vector<8x8x8xf32>
    %25 = arith.truncf %24 : vector<8x8x8xf32> to vector<8x8x8xbf16>
    %c0_13 = arith.constant 0 : index
    %c0_14 = arith.constant 0 : index
    %c0_15 = arith.constant 0 : index
    %c0_16 = arith.constant 0 : index
    %26 = vector.load %arg6[%c0_13, %c0_14, %c0_15, %c0_16] : memref<1x8x8x8xbf16, #tpu.memory_space<vmem>>, vector<1x8x8x8xbf16>
    %27 = vector.shape_cast %26 : vector<1x8x8x8xbf16> to vector<8x8x8xbf16>
    %28 = vector.shape_cast %25 : vector<8x8x8xbf16> to vector<1x8x8x8xbf16>
    tpu.vector_store %arg6[%c0_13, %c0_14, %c0_15, %c0_16], %28 {strides = array<i32>} : memref<1x8x8x8xbf16, #tpu.memory_space<vmem>>, vector<1x8x8x8xbf16>,
    return
  }
  func.func @transform_0(%arg0: i32, %arg1: i32) -> (i32, i32, i32, i32) {
    %c0_i32 = arith.constant 0 : i32
    %c0_i32_0 = arith.constant 0 : i32
    %c0_i32_1 = arith.constant 0 : i32
    return %arg0, %arg1, %c0_i32, %c0_i32_0 : i32, i32, i32, i32
  }
  func.func @transform_1(%arg0: i32, %arg1: i32) -> (i32, i32, i32, i32) {
    %c1_i32 = arith.constant 1 : i32
    %0 = arith.addi %arg1, %c1_i32 : i32
    %c8_i32 = arith.constant 8 : i32
    %1 = arith.muli %0, %c8_i32 : i32
    %c0_i32 = arith.constant 0 : i32
    %c0_i32_0 = arith.constant 0 : i32
    %c0_i32_1 = arith.constant 0 : i32
    return %arg0, %1, %c0_i32, %c0_i32_0 : i32, i32, i32, i32
  }
  func.func @transform_2(%arg0: i32, %arg1: i32) -> (i32, i32) {
    %c0_i32 = arith.constant 0 : i32
    %c0_i32_0 = arith.constant 0 : i32
    %c0_i32_1 = arith.constant 0 : i32
    return %c0_i32, %c0_i32_0 : i32, i32
  }
  func.func @transform_3(%arg0: i32, %arg1: i32) -> (i32, i32) {
    %c0_i32 = arith.constant 0 : i32
    %c0_i32_0 = arith.constant 0 : i32
    %c0_i32_1 = arith.constant 0 : i32
    return %c0_i32, %c0_i32_0 : i32, i32
  }
  func.func @transform_4(%arg0: i32, %arg1: i32) -> (i32, i32, i32, i32) {
    %c0_i32 = arith.constant 0 : i32
    %c0_i32_0 = arith.constant 0 : i32
    %c0_i32_1 = arith.constant 0 : i32
    return %arg0, %arg1, %c0_i32, %c0_i32_0 : i32, i32, i32, i32
  }
}

</mosaic_0001>

<llo_original>
// kernel: tpu_custom_call.1
$region0: #{tpu_custom_call.1}
  #allocation0 [shape = 'u32[]', space=smem, size = 0x4, offset = 0x4, fixed_abs, tag = 'smem constant byte address 0x4 - core index']
  #allocation1 [shape = 'u32[72,128]{1,0:T(1,128)}', space=vmem, size = 0x9000, scoped, tag = 'internal scratch']
  %s0 = inlined_call_operand.vmem [shape: bf16[2,9,9,16], index: 0, kind: input, shape index: {}]
  %s1 = inlined_call_operand.vmem [shape: bf16[2,9,9,16], index: 1, kind: input, shape index: {}]
  %s2 = inlined_call_operand.vmem [shape: bf16[64,8], index: 2, kind: input, shape index: {}]
  %s3 = inlined_call_operand.vmem [shape: f32[1,8], index: 3, kind: input, shape index: {}]
  %s4 = inlined_call_operand.hbm [shape: bf16[2,8,8,8], index: 4, kind: output, shape index: {}]
  %s5 = sld [smem:[#allocation0]]
  $region49: #{tpu_custom_call.1} parent=0
    _
  %s7 = ssub.s32 1, %s5
  %s8 = scalar_select 0, %s7, %s5
  $region1: #{tpu_custom_call.1} parent=0
    #allocation2 [shape = 'u8[32768]{0}', space=vmem, size = 0x8000, scoped, tag = 'output window, operand 0']
    #allocation3 [shape = 's32[2]{0}', space=sflag, size = 0x8, scoped, tag = 'scoped memory for tpu_custom_call.1']
    %9 = vsyncpa [#allocation3], 0
    %s10 = scalar_lea.sflag [#allocation3], 1
    %11 = vsyncpa %s10, 0
    loop: start=0, step=1, limit=4
    $region2: #{tpu_custom_call.1} parent=1 // loop_pre_header
      _
    $region3: #{tpu_custom_call.1} parent=1 // loop_header
      %s13 = sphi 0, %s17
      %p14 = scmp.ge.s32.totalorder %s13, 4
      %s20 = sphi 0, %s32
      %s21 = sphi 0, %s28
      %s22 = sphi 0, %s20
      %s23 = sphi 0, %s21
      %s24 = sphi 0, %s22
      %s25 = sphi 0, %s23
      %s37 = sphi 0, %s39
      %s40 = sphi 0, %s37
      %s41 = sphi 0, %s40
      %s57 = sphi 0, %s41
      %s69 = sphi 0, %s71
      %s72 = sphi 0, %s69
      %s73 = sphi 0, %s72
      %s89 = sphi 0, %s73
      %s93 = sphi 0, %s93
      %s95 = sphi 0, %s93
      %s96 = sphi 0, %s95
      %s110 = sphi 0, %s96
      %s114 = sphi 0, %s114
      %s116 = sphi 0, %s114
      %s117 = sphi 0, %s116
      %s131 = sphi 0, %s117
      %s139 = sphi 0, %s141
      %s142 = sphi 0, %s139
      %s143 = sphi 0, %s142
      %s159 = sphi 0, %s143
    $region4: #{tpu_custom_call.1} parent=1 // loop_header_branch
      %16 = sbr.rel (%p14) target = $region8
    $region5: #{tpu_custom_call.1} parent=1 // loop_body
      %s18 = ssub.s32 %s13, 1
      %s19 = ssub.s32 %s13, 2
      %s26 = sadd.s32 1, %s21
      %p27 = scmp.ge.s32.totalorder %s26, 1
      %s28 = scalar_select %p27, 0, %s26
      %s29 = sadd.s32 1, %s20
      %s30 = scalar_select %p27, %s29, %s20
      %p31 = scmp.ge.s32.totalorder %s30, 2
      %s32 = scalar_select %p31, 0, %s30
      %s33 = ssub.s32 %s20, %s32
      %s34 = ssub.s32 %s21, %s28
      %s35 = sor.u32 %s33, %s34
      %p36 = scmp.eq.s32.totalorder %s35, 0
      %s38 = sadd.s32 %s37, 1
      %s39 = scalar_select %p36, %s37, %s38
      %p42 = pneg %p36
      %p43 = scmp.eq.s32.totalorder %s13, 1
      %p44 = por %p42, %p43
      %p45 = scmp.ne.s32.totalorder %s37, %s40
      %p46 = scmp.eq.s32.totalorder %s13, 0
      %p47 = por %p45, %p46
      %p48 = scmp.ne.s32.totalorder %s37, %s40
      %p49 = scmp.eq.s32.totalorder %s18, 1
      %p50 = por %p48, %p49
      %p51 = scmp.ne.s32.totalorder %s40, %s41
      %p52 = scmp.eq.s32.totalorder %s18, 0
      %p53 = por %p51, %p52
      %p54 = scmp.ne.s32.totalorder %s40, %s41
      %p55 = scmp.eq.s32.totalorder %s19, 1
      %p56 = por %p54, %p55
      %p58 = scmp.ne.s32.totalorder %s41, %s57
      %p59 = scmp.eq.s32.totalorder %s19, 0
      %p60 = por %p58, %p59
      %s61 = sadd.s32 %s21, 1
      %s62 = smul.u32 %s61, 8
      %s63 = sadd.s32 %s28, 1
      %s64 = smul.u32 %s63, 8
      %s65 = ssub.s32 %s20, %s32
      %s66 = ssub.s32 %s62, %s64
      %s67 = sor.u32 %s65, %s66
      %p68 = scmp.eq.s32.totalorder %s67, 0
      %s70 = sadd.s32 %s69, 1
      %s71 = scalar_select %p68, %s69, %s70
      %p74 = pneg %p68
      %p75 = scmp.eq.s32.totalorder %s13, 1
      %p76 = por %p74, %p75
      %p77 = scmp.ne.s32.totalorder %s69, %s72
      %p78 = scmp.eq.s32.totalorder %s13, 0
      %p79 = por %p77, %p78
      %p80 = scmp.ne.s32.totalorder %s69, %s72
      %p81 = scmp.eq.s32.totalorder %s18, 1
      %p82 = por %p80, %p81
      %p83 = scmp.ne.s32.totalorder %s72, %s73
      %p84 = scmp.eq.s32.totalorder %s18, 0
      %p85 = por %p83, %p84
      %p86 = scmp.ne.s32.totalorder %s72, %s73
      %p87 = scmp.eq.s32.totalorder %s19, 1
      %p88 = por %p86, %p87
      %p90 = scmp.ne.s32.totalorder %s73, %s89
      %p91 = scmp.eq.s32.totalorder %s19, 0
      %p92 = por %p90, %p91
      %s94 = sadd.s32 %s93, 1
      %p97 = scmp.eq.s32.totalorder %s13, 1
      %p98 = scmp.ne.s32.totalorder %s93, %s95
      %p99 = scmp.eq.s32.totalorder %s13, 0
      %p100 = por %p98, %p99
      %p101 = scmp.ne.s32.totalorder %s93, %s95
      %p102 = scmp.eq.s32.totalorder %s18, 1
      %p103 = por %p101, %p102
      %p104 = scmp.ne.s32.totalorder %s95, %s96
      %p105 = scmp.eq.s32.totalorder %s18, 0
      %p106 = por %p104, %p105
      %p107 = scmp.ne.s32.totalorder %s95, %s96
      %p108 = scmp.eq.s32.totalorder %s19, 1
      %p109 = por %p107, %p108
      %p111 = scmp.ne.s32.totalorder %s96, %s110
      %p112 = scmp.eq.s32.totalorder %s19, 0
      %p113 = por %p111, %p112
      %s115 = sadd.s32 %s114, 1
      %p118 = scmp.eq.s32.totalorder %s13, 1
      %p119 = scmp.ne.s32.totalorder %s114, %s116
      %p120 = scmp.eq.s32.totalorder %s13, 0
      %p121 = por %p119, %p120
      %p122 = scmp.ne.s32.totalorder %s114, %s116
      %p123 = scmp.eq.s32.totalorder %s18, 1
      %p124 = por %p122, %p123
      %p125 = scmp.ne.s32.totalorder %s116, %s117
      %p126 = scmp.eq.s32.totalorder %s18, 0
      %p127 = por %p125, %p126
      %p128 = scmp.ne.s32.totalorder %s116, %s117
      %p129 = scmp.eq.s32.totalorder %s19, 1
      %p130 = por %p128, %p129
      %p132 = scmp.ne.s32.totalorder %s117, %s131
      %p133 = scmp.eq.s32.totalorder %s19, 0
      %p134 = por %p132, %p133
      %s135 = ssub.s32 %s20, %s32
      %s136 = ssub.s32 %s21, %s28
      %s137 = sor.u32 %s135, %s136
      %p138 = scmp.eq.s32.totalorder %s137, 0
      %s140 = sadd.s32 %s139, 1
      %s141 = scalar_select %p138, %s139, %s140
      %p144 = pneg %p138
      %p145 = scmp.eq.s32.totalorder %s13, 1
      %p146 = por %p144, %p145
      %p147 = scmp.ne.s32.totalorder %s139, %s142
      %p148 = scmp.eq.s32.totalorder %s13, 0
      %p149 = por %p147, %p148
      %p150 = scmp.ne.s32.totalorder %s139, %s142
      %p151 = scmp.eq.s32.totalorder %s18, 1
      %p152 = por %p150, %p151
      %p153 = scmp.ne.s32.totalorder %s142, %s143
      %p154 = scmp.eq.s32.totalorder %s18, 0
      %p155 = por %p153, %p154
      %p156 = scmp.ne.s32.totalorder %s142, %s143
      %p157 = scmp.eq.s32.totalorder %s19, 1
      %p158 = por %p156, %p157
      %p160 = scmp.ne.s32.totalorder %s143, %s159
      %p161 = scmp.eq.s32.totalorder %s19, 0
      %p162 = por %p160, %p161
      %p163 = scmp.le.s32.totalorder 1, %s13
      %p164 = scmp.lt.s32.totalorder %s13, 3
      %p165 = pnand %p163, %p164
      %p166 = pneg %p165
      // Predicated region
      $region9: #{tpu_custom_call.1} parent=5 // pred_check
        _
      $region10: #{tpu_custom_call.1} parent=5 // pred_check_branch
        %168 = sbr.rel (%p165) target = $region12
      $region11: #{tpu_custom_call.1} parent=5 // pred_region
        %s169 = ssub.s32 %s13, 1
        // Predicated region
        $region13: #{tpu_custom_call.1} parent=11 // pred_check
          %p170 = pneg %p106
        $region14: #{tpu_custom_call.1} parent=11 // pred_check_branch
          %172 = sbr.rel (%p170) target = $region16
        $region15: #{tpu_custom_call.1} parent=11 // pred_region
          _
        $region16: #{tpu_custom_call.1} parent=11 // pred_fallthru
          _
        // Predicated region
        $region17: #{tpu_custom_call.1} parent=11 // pred_check
          %p173 = pneg %p127
        $region18: #{tpu_custom_call.1} parent=11 // pred_check_branch
          %175 = sbr.rel (%p173) target = $region20
        $region19: #{tpu_custom_call.1} parent=11 // pred_region
          _
        $region20: #{tpu_custom_call.1} parent=11 // pred_fallthru
          _
      $region12: #{tpu_custom_call.1} parent=5 // pred_fallthru
        _
      %p176 = scmp.lt.s32.totalorder %s13, 2
      // Predicated region
      $region21: #{tpu_custom_call.1} parent=5 // pred_check
        %p177 = pneg %p176
      $region22: #{tpu_custom_call.1} parent=5 // pred_check_branch
        %179 = sbr.rel (%p177) target = $region24
      $region23: #{tpu_custom_call.1} parent=5 // pred_region
        // Predicated region
        $region25: #{tpu_custom_call.1} parent=23 // pred_check
          %p180 = pneg %p47
        $region26: #{tpu_custom_call.1} parent=23 // pred_check_branch
          %182 = sbr.rel (%p180) target = $region28
        $region27: #{tpu_custom_call.1} parent=23 // pred_region
          %s183 = smul.u32 8, %s21
          %s184 = ssub.s32 9, %s183
          %p185 = scmp.lt.s32.totalorder %s184, 8
          %s186 = scalar_select %p185, %s184, 8
          %s187 = smul.u32 4, %s186
          %s188 = smul.u32 %s187, 2
          %p189 = scmp.lt.s32.totalorder %s20, 1
          %s190 = scalar_select %p189, %s20, 1
          %p191 = scmp.lt.s32.totalorder %s183, 8
          %s192 = scalar_select %p191, %s183, 8
          %s193 = smul.addr %s192, 2
          %s194 = smul.addr %s190, 18
          %s195 = sadd.s32 %s193, %s194
          %s196 = smul.addr %s195, 4
          %s197 = scalar_lea.vmem %s0, %s196
          %s198 = smul.u32 8, %s21
          %s199 = ssub.s32 9, %s198
          %p200 = scmp.lt.s32.totalorder %s199, 8
          %s201 = scalar_select %p200, %s199, 8
          %s202 = smul.u32 4, %s201
          %s203 = smul.u32 %s202, 2
        $region28: #{tpu_custom_call.1} parent=23 // pred_fallthru
          _
        // Predicated region
        $region29: #{tpu_custom_call.1} parent=23 // pred_check
          %p204 = pneg %p79
        $region30: #{tpu_custom_call.1} parent=23 // pred_check_branch
          %206 = sbr.rel (%p204) target = $region32
        $region31: #{tpu_custom_call.1} parent=23 // pred_region
          %s207 = sadd.s32 %s21, 1
          %s208 = smul.u32 %s207, 8
          %p209 = scmp.lt.s32.totalorder %s20, 1
          %s210 = scalar_select %p209, %s20, 1
          %p211 = scmp.lt.s32.totalorder %s208, 8
          %s212 = scalar_select %p211, %s208, 8
          %s213 = smul.addr %s212, 2
          %s214 = smul.addr %s210, 18
          %s215 = sadd.s32 %s213, %s214
          %s216 = smul.addr %s215, 4
          %s217 = scalar_lea.vmem %s1, %s216
          %s218 = sadd.s32 %s21, 1
          %s219 = smul.u32 %s218, 8
        $region32: #{tpu_custom_call.1} parent=23 // pred_fallthru
          _
      $region24: #{tpu_custom_call.1} parent=5 // pred_fallthru
        _
      %p220 = scmp.le.s32.totalorder 1, %s13
      %p221 = scmp.lt.s32.totalorder %s13, 3
      %p222 = pnand %p220, %p221
      %p223 = pneg %p222
      // Predicated region
      $region33: #{tpu_custom_call.1} parent=5 // pred_check
        _
      $region34: #{tpu_custom_call.1} parent=5 // pred_check_branch
        %225 = sbr.rel (%p222) target = $region36
      $region35: #{tpu_custom_call.1} parent=5 // pred_region
        %s226 = ssub.s32 %s13, 1
        %s227 = smul.u32 8, %s23
        %s228 = ssub.s32 9, %s227
        %p229 = scmp.lt.s32.totalorder %s228, 8
        %s230 = scalar_select %p229, %s228, 8
        %s231 = smul.u32 4, %s230
        %s232 = smul.u32 %s231, 2
        %p233 = scmp.lt.s32.totalorder %s22, 1
        %s234 = scalar_select %p233, %s22, 1
        %p235 = scmp.lt.s32.totalorder %s227, 8
        %s236 = scalar_select %p235, %s227, 8
        %s237 = smul.addr %s236, 2
        %s238 = smul.addr %s234, 18
        %s239 = sadd.s32 %s237, %s238
        %s240 = smul.addr %s239, 4
        %s241 = scalar_lea.vmem %s0, %s240
        %p242 = pneg %p53
        %p243 = pneg %p50
        %s244 = sadd.s32 %s23, 1
        %s245 = smul.u32 %s244, 8
        %p246 = scmp.lt.s32.totalorder %s22, 1
        %s247 = scalar_select %p246, %s22, 1
        %p248 = scmp.lt.s32.totalorder %s245, 8
        %s249 = scalar_select %p248, %s245, 8
        %s250 = smul.addr %s249, 2
        %s251 = smul.addr %s247, 18
        %s252 = sadd.s32 %s250, %s251
        %s253 = smul.addr %s252, 4
        %s254 = scalar_lea.vmem %s1, %s253
        %p255 = pneg %p85
        %p256 = pneg %p82
        %p257 = pneg %p106
        %p258 = pneg %p103
        %p259 = pneg %p127
        %p260 = pneg %p124
        %p261 = pneg %p155
        %p262 = pneg %p152
        %s263 = sand.u32 %s142, 1
        %s264 = scalar_lea.sflag [#allocation3], %s263
        %s265 = sand.u32 %s142, 1
        %s266 = smul.addr %s265, 32
        %s267 = scalar_lea.vmem [#allocation2], %s266
        %s268 = smul.u32 8, %s23
        %s269 = ssub.s32 9, %s268
        %p270 = scmp.lt.s32.totalorder %s269, 8
        %s271 = scalar_select %p270, %s269, 8
        %s272 = smul.u32 4, %s271
        %s273 = smul.u32 %s272, 2
        %p274 = scmp.lt.s32.totalorder %s22, 1
        %s275 = scalar_select %p274, %s22, 1
        %p276 = scmp.lt.s32.totalorder %s268, 8
        %s277 = scalar_select %p276, %s268, 8
        %s278 = smul.addr %s277, 2
        %s279 = smul.addr %s275, 18
        %s280 = sadd.s32 %s278, %s279
        %s281 = smul.addr %s280, 4
        %s282 = scalar_lea.vmem %s0, %s281
        %s283 = smul.u32 8, %s23
        %s284 = ssub.s32 9, %s283
        %p285 = scmp.lt.s32.totalorder %s284, 8
        %s286 = scalar_select %p285, %s284, 8
        %s287 = smul.u32 4, %s286
        %s288 = smul.u32 %s287, 2
        %s289 = sadd.s32 %s23, 1
        %s290 = smul.u32 %s289, 8
        %p291 = scmp.lt.s32.totalorder %s22, 1
        %s292 = scalar_select %p291, %s22, 1
        %p293 = scmp.lt.s32.totalorder %s290, 8
        %s294 = scalar_select %p293, %s290, 8
        %s295 = smul.addr %s294, 2
        %s296 = smul.addr %s292, 18
        %s297 = sadd.s32 %s295, %s296
        %s298 = smul.addr %s297, 4
        %s299 = scalar_lea.vmem %s1, %s298
        %s300 = sadd.s32 %s23, 1
        %s301 = smul.u32 %s300, 8
        %s302 = smul.u32 8, %s23
        %v304 = vld [vmem:[%s282] sm:$0xf]
        %v305 = vld [vmem:[%s282 + $0x4] sm:$0x1]
        %v306 = vld [vmem:[%s282 + $0x8] sm:$0xf]
        %v307 = vld [vmem:[%s282 + $0xc] sm:$0x1]
        %v308 = vld [vmem:[%s282 + $0x10] sm:$0xf]
        %v309 = vld [vmem:[%s282 + $0x14] sm:$0x1]
        %v310 = vld [vmem:[%s282 + $0x18] sm:$0xf]
        %v311 = vld [vmem:[%s282 + $0x1c] sm:$0x1]
        %v312 = vld [vmem:[%s282 + $0x20] sm:$0xf]
        %v313 = vld [vmem:[%s282 + $0x24] sm:$0x1]
        %v314 = vld [vmem:[%s282 + $0x28] sm:$0xf]
        %v315 = vld [vmem:[%s282 + $0x2c] sm:$0x1]
        %v316 = vld [vmem:[%s282 + $0x30] sm:$0xf]
        %v317 = vld [vmem:[%s282 + $0x34] sm:$0x1]
        %v318 = vld [vmem:[%s282 + $0x38] sm:$0xf]
        %v319 = vld [vmem:[%s282 + $0x3c] sm:$0x1]
        %v320 = vld [vmem:[%s299] sm:$0xf]
        %v321 = vld [vmem:[%s299 + $0x4] sm:$0x1]
        %vm322 = vsmask.f32 3328
        %vm323 = vsmask.f32 7440
        %vm324 = vmor %vm322, %vm323
        %v326 = vshrl.u32 %v304, 16
        %v328 = vrot.slane %v326, 4
        %v329 = vshll.u32 %v304, 16
        %v331 = vrot.slane %v329, 5
        %v332 = vor.u32 %v328, %v331
        %v333 = vrot.slane %v332, 4
        %v335 = vshll.u32 %v305, 16
        %v337 = vrot.slane %v335, 5
        %v338 = vsel %vm324, %v333, %v337
        %v340 = vshrl.u32 %v306, 16
        %v342 = vrot.slane %v340, 4
        %v343 = vshll.u32 %v306, 16
        %v345 = vrot.slane %v343, 5
        %v346 = vor.u32 %v342, %v345
        %v347 = vrot.slane %v346, 4
        %v349 = vshll.u32 %v307, 16
        %v351 = vrot.slane %v349, 5
        %v352 = vsel %vm324, %v347, %v351
        %v354 = vshrl.u32 %v308, 16
        %v356 = vrot.slane %v354, 4
        %v357 = vshll.u32 %v308, 16
        %v359 = vrot.slane %v357, 5
        %v360 = vor.u32 %v356, %v359
        %v361 = vrot.slane %v360, 4
        %v363 = vshll.u32 %v309, 16
        %v365 = vrot.slane %v363, 5
        %v366 = vsel %vm324, %v361, %v365
        %v368 = vshrl.u32 %v310, 16
        %v370 = vrot.slane %v368, 4
        %v371 = vshll.u32 %v310, 16
        %v373 = vrot.slane %v371, 5
        %v374 = vor.u32 %v370, %v373
        %v375 = vrot.slane %v374, 4
        %v377 = vshll.u32 %v311, 16
        %v379 = vrot.slane %v377, 5
        %v380 = vsel %vm324, %v375, %v379
        %v382 = vshrl.u32 %v312, 16
        %v384 = vrot.slane %v382, 4
        %v385 = vshll.u32 %v312, 16
        %v387 = vrot.slane %v385, 5
        %v388 = vor.u32 %v384, %v387
        %v389 = vrot.slane %v388, 4
        %v391 = vshll.u32 %v313, 16
        %v393 = vrot.slane %v391, 5
        %v394 = vsel %vm324, %v389, %v393
        %v396 = vshrl.u32 %v314, 16
        %v398 = vrot.slane %v396, 4
        %v399 = vshll.u32 %v314, 16
        %v401 = vrot.slane %v399, 5
        %v402 = vor.u32 %v398, %v401
        %v403 = vrot.slane %v402, 4
        %v405 = vshll.u32 %v315, 16
        %v407 = vrot.slane %v405, 5
        %v408 = vsel %vm324, %v403, %v407
        %v410 = vshrl.u32 %v316, 16
        %v412 = vrot.slane %v410, 4
        %v413 = vshll.u32 %v316, 16
        %v415 = vrot.slane %v413, 5
        %v416 = vor.u32 %v412, %v415
        %v417 = vrot.slane %v416, 4
        %v419 = vshll.u32 %v317, 16
        %v421 = vrot.slane %v419, 5
        %v422 = vsel %vm324, %v417, %v421
        %v424 = vshrl.u32 %v318, 16
        %v426 = vrot.slane %v424, 4
        %v427 = vshll.u32 %v318, 16
        %v429 = vrot.slane %v427, 5
        %v430 = vor.u32 %v426, %v429
        %v431 = vrot.slane %v430, 4
        %v433 = vshll.u32 %v319, 16
        %v435 = vrot.slane %v433, 5
        %v436 = vsel %vm324, %v431, %v435
        %v438 = vshrl.u32 %v320, 16
        %v440 = vrot.slane %v438, 4
        %v441 = vshll.u32 %v320, 16
        %v443 = vrot.slane %v441, 5
        %v444 = vor.u32 %v440, %v443
        %v445 = vrot.slane %v444, 4
        %v447 = vshll.u32 %v321, 16
        %v449 = vrot.slane %v447, 5
        %v450 = vsel %vm324, %v445, %v449
        %v459 = vunpack.c.l.b16 %v304
        %v460 = vunpack.c.l.b16 %v306
        %v461 = vunpack.c.l.b16 %v308
        %v462 = vunpack.c.l.b16 %v310
        %v463 = vunpack.c.l.b16 %v312
        %v464 = vunpack.c.l.b16 %v314
        %v465 = vunpack.c.l.b16 %v316
        %v466 = vunpack.c.l.b16 %v318
        %v467 = vpack.c.b16 %v460, %v459
        %v468 = vpack.c.b16 %v462, %v461
        %v469 = vpack.c.b16 %v464, %v463
        %v470 = vpack.c.b16 %v466, %v465
        %v471 = vunpack.c.l.b16 %v338
        %v472 = vunpack.c.l.b16 %v352
        %v473 = vunpack.c.l.b16 %v366
        %v474 = vunpack.c.l.b16 %v380
        %v475 = vunpack.c.l.b16 %v394
        %v476 = vunpack.c.l.b16 %v408
        %v477 = vunpack.c.l.b16 %v422
        %v478 = vunpack.c.l.b16 %v436
        %v479 = vpack.c.b16 %v472, %v471
        %v480 = vpack.c.b16 %v474, %v473
        %v481 = vpack.c.b16 %v476, %v475
        %v482 = vpack.c.b16 %v478, %v477
        %483 = vrot.lane.b32.xlu0 %v479, 16
        %v484 = vpop.permute.xlu0 %483
        %485 = vrot.lane.b32.xlu0 %v480, 16
        %v486 = vpop.permute.xlu0 %485
        %487 = vrot.lane.b32.xlu0 %v481, 16
        %v488 = vpop.permute.xlu0 %487
        %489 = vrot.lane.b32.xlu0 %v482, 16
        %v490 = vpop.permute.xlu0 %489
        %v492 = vunpack.c.l.b16 %v320
        %v493 = vpack.c.b16 %v461, %v460
        %v494 = vpack.c.b16 %v463, %v462
        %v495 = vpack.c.b16 %v465, %v464
        %v496 = vpack.c.b16 %v492, %v466
        %497 = vrot.lane.b32.xlu0 %v493, 32
        %v498 = vpop.permute.xlu0 %497
        %499 = vrot.lane.b32.xlu0 %v494, 32
        %v500 = vpop.permute.xlu0 %499
        %501 = vrot.lane.b32.xlu0 %v495, 32
        %v502 = vpop.permute.xlu0 %501
        %503 = vrot.lane.b32.xlu0 %v496, 32
        %v504 = vpop.permute.xlu0 %503
        %v505 = vunpack.c.l.b16 %v450
        %v506 = vpack.c.b16 %v473, %v472
        %v507 = vpack.c.b16 %v475, %v474
        %v508 = vpack.c.b16 %v477, %v476
        %v509 = vpack.c.b16 %v505, %v478
        %510 = vrot.lane.b32.xlu0 %v506, 48
        %v511 = vpop.permute.xlu0 %510
        %512 = vrot.lane.b32.xlu0 %v507, 48
        %v513 = vpop.permute.xlu0 %512
        %514 = vrot.lane.b32.xlu0 %v508, 48
        %v515 = vpop.permute.xlu0 %514
        %516 = vrot.lane.b32.xlu0 %v509, 48
        %v517 = vpop.permute.xlu0 %516
        %vm518 = vcmask 130048
        %v521 = vsel %vm518, %v467, %v484
        %v524 = vsel %vm518, %v468, %v486
        %v527 = vsel %vm518, %v469, %v488
        %v530 = vsel %vm518, %v470, %v490
        %vm531 = vcmask 261120
        %v533 = vsel %vm531, %v521, %v498
        %v535 = vsel %vm531, %v524, %v500
        %v537 = vsel %vm531, %v527, %v502
        %v539 = vsel %vm531, %v530, %v504
        %vm540 = vcmask 392192
        %v542 = vsel %vm540, %v533, %v511
        %v544 = vsel %vm540, %v535, %v513
        %v546 = vsel %vm540, %v537, %v515
        %v548 = vsel %vm540, %v539, %v517
        %v549 = vld [vmem:[%s2] sm:$0xf]
        %v550 = vld [vmem:[%s2 + $0x4] sm:$0xf]
        %v551 = vld [vmem:[%s2 + $0x8] sm:$0xf]
        %v552 = vld [vmem:[%s2 + $0xc] sm:$0xf]
        %v553 = vld [vmem:[%s2 + $0x10] sm:$0xf]
        %v554 = vld [vmem:[%s2 + $0x14] sm:$0xf]
        %v555 = vld [vmem:[%s2 + $0x18] sm:$0xf]
        %v556 = vld [vmem:[%s2 + $0x1c] sm:$0xf]
        %v557 = vld [vmem:[%s3] sm:$0x1]
        %v559 = vperm.slane %v557, 0
        %v569 = vunpack.c.l.b16 %v549
        %v570 = vunpack.c.l.b16 %v550
        %v571 = vunpack.c.l.b16 %v551
        %v572 = vunpack.c.l.b16 %v552
        %v573 = vunpack.c.l.b16 %v553
        %v574 = vunpack.c.l.b16 %v554
        %v575 = vunpack.c.l.b16 %v555
        %v576 = vunpack.c.l.b16 %v556
        %v577 = vpack.c.b16 %v570, %v569
        %v578 = vpack.c.b16 %v572, %v571
        %v579 = vpack.c.b16 %v574, %v573
        %v580 = vpack.c.b16 %v576, %v575
        %vm585 = vcmask 523264
        %v586 = vsel %vm585, %v542, 0
        %v588 = vsel %vm585, %v544, 0
        %v590 = vsel %vm585, %v546, 0
        %v592 = vsel %vm585, %v548, 0
        %594 = vmatpush.bf16.msra.mxu0 0
        %595 = vmatpush.bf16.msra.mxu0 0
        %596 = vmatpush.bf16.msra.mxu0 0
        %597 = vmatpush.bf16.msra.mxu0 0
        %598 = vmatpush.bf16.msra.mxu0 %v580
        %599 = vmatpush.bf16.msra.mxu0 %v579
        %600 = vmatpush.bf16.msra.mxu0 %v578
        %601 = vmatpush.bf16.msra.mxu0 %v577
        %602 = vmatmul.bf16.gmra.mxu0 %v586
        %v603 = vpop.f32.mrf.mxu0
        %v604 = vadd.f32 %v559, %v603
        %v605 = vpop.f32.mrf.mxu0
        %v606 = vadd.f32 %v559, %v605
        %607 = vmatmul.bf16.gmra.mxu0 %v588
        %v608 = vpop.f32.mrf.mxu0
        %v609 = vadd.f32 %v559, %v608
        %v610 = vpop.f32.mrf.mxu0
        %v611 = vadd.f32 %v559, %v610
        %612 = vmatmul.bf16.gmra.mxu0 %v590
        %v613 = vpop.f32.mrf.mxu0
        %v614 = vadd.f32 %v559, %v613
        %v615 = vpop.f32.mrf.mxu0
        %v616 = vadd.f32 %v559, %v615
        %617 = vmatmul.bf16.gmra.mxu0 %v592
        %v618 = vpop.f32.mrf.mxu0
        %v619 = vadd.f32 %v559, %v618
        %v620 = vpop.f32.mrf.mxu0
        %v621 = vadd.f32 %v559, %v620
        %622 = vdwg.mxu0
        %vm623 = vcmp.ge.f32.partialorder %v604, 0.0
        %vm624 = vcmp.ge.f32.partialorder %v606, 0.0
        %vm625 = vcmp.ge.f32.partialorder %v609, 0.0
        %vm626 = vcmp.ge.f32.partialorder %v611, 0.0
        %vm627 = vcmp.ge.f32.partialorder %v614, 0.0
        %vm628 = vcmp.ge.f32.partialorder %v616, 0.0
        %vm629 = vcmp.ge.f32.partialorder %v619, 0.0
        %vm630 = vcmp.ge.f32.partialorder %v621, 0.0
        %v631 = vmul.f32 %v604, 0.2
        %v632 = vmul.f32 %v606, 0.2
        %v633 = vmul.f32 %v609, 0.2
        %v634 = vmul.f32 %v611, 0.2
        %v635 = vmul.f32 %v614, 0.2
        %v636 = vmul.f32 %v616, 0.2
        %v637 = vmul.f32 %v619, 0.2
        %v638 = vmul.f32 %v621, 0.2
        %v639 = vsel %vm623, %v604, %v631
        %v640 = vsel %vm624, %v606, %v632
        %v641 = vsel %vm625, %v609, %v633
        %v642 = vsel %vm626, %v611, %v634
        %v643 = vsel %vm627, %v614, %v635
        %v644 = vsel %vm628, %v616, %v636
        %v645 = vsel %vm629, %v619, %v637
        %v646 = vsel %vm630, %v621, %v638
        %v647 = vpack.c.bf16 %v639, %v639
        %v648 = vpack.c.bf16 %v640, %v640
        %v649 = vpack.c.bf16 %v641, %v641
        %v650 = vpack.c.bf16 %v642, %v642
        %v651 = vpack.c.bf16 %v643, %v643
        %v652 = vpack.c.bf16 %v644, %v644
        %v653 = vpack.c.bf16 %v645, %v645
        %v654 = vpack.c.bf16 %v646, %v646
        %vm655 = vcmask 60416
        %656 = vst.msk [vmem:[%s267] sm:$0xf] %vm655, %v647
        %657 = vst.msk [vmem:[%s267 + $0x4] sm:$0xf] %vm655, %v648
        %658 = vst.msk [vmem:[%s267 + $0x8] sm:$0xf] %vm655, %v649
        %659 = vst.msk [vmem:[%s267 + $0xc] sm:$0xf] %vm655, %v650
        %660 = vst.msk [vmem:[%s267 + $0x10] sm:$0xf] %vm655, %v651
        %661 = vst.msk [vmem:[%s267 + $0x14] sm:$0xf] %vm655, %v652
        %662 = vst.msk [vmem:[%s267 + $0x18] sm:$0xf] %vm655, %v653
        %663 = vst.msk [vmem:[%s267 + $0x1c] sm:$0xf] %vm655, %v654
        %s664 = sand.u32 %s142, 1
        %s665 = scalar_lea.sflag [#allocation3], %s664
        %s666 = sand.u32 %s142, 1
        %s667 = smul.addr %s666, 32
        %s668 = scalar_lea.vmem [#allocation2], %s667
        // Predicated region
        $region37: #{tpu_custom_call.1} parent=35 // pred_check
          %p669 = pneg %p152
        $region38: #{tpu_custom_call.1} parent=35 // pred_check_branch
          %671 = sbr.rel (%p669) target = $region40
        $region39: #{tpu_custom_call.1} parent=35 // pred_region
          %s672 = smul.u32 8, %s23
          %674 = vsyncadd %s665, 0
          %s675 = smul.addr %s22, 8
          %s676 = sadd.s32 %s672, %s675
          %s677 = smul.addr %s676, 4
          %s678 = scalar_lea.hbm %s4, %s677
          %s679 = sshll.u32 %s668, 4
          %s680 = int_to_ptr.vmem [resolvable:$true] %s679
          %s681 = sshll.u32 %s678, 4
          %s682 = int_to_ptr.hbm [resolvable:$true] %s681
          %687 = dma.vmem_to_hbm [thread:$0]  %s680, 512, %s682, %s665, 64, 64, 4
        $region40: #{tpu_custom_call.1} parent=35 // pred_fallthru
          _
      $region36: #{tpu_custom_call.1} parent=5 // pred_fallthru
        _
      %p688 = scmp.le.s32.totalorder 2, %s13
      // Predicated region
      $region41: #{tpu_custom_call.1} parent=5 // pred_check
        %p689 = pneg %p688
      $region42: #{tpu_custom_call.1} parent=5 // pred_check_branch
        %691 = sbr.rel (%p689) target = $region44
      $region43: #{tpu_custom_call.1} parent=5 // pred_region
        %s692 = ssub.s32 %s13, 2
        // Predicated region
        $region45: #{tpu_custom_call.1} parent=43 // pred_check
          %p693 = pneg %p158
        $region46: #{tpu_custom_call.1} parent=43 // pred_check_branch
          %695 = sbr.rel (%p693) target = $region48
        $region47: #{tpu_custom_call.1} parent=43 // pred_region
          %s696 = sand.u32 %s143, 1
          %s697 = scalar_lea.sflag [#allocation3], %s696
          %s698 = sand.u32 %s143, 1
          %s699 = smul.addr %s698, 32
          %s700 = scalar_lea.vmem [#allocation2], %s699
          %702 = dma.done %s697, 512
        $region48: #{tpu_custom_call.1} parent=43 // pred_fallthru
          _
      $region44: #{tpu_custom_call.1} parent=5 // pred_fallthru
        _
    $region6: #{tpu_custom_call.1} parent=1 // loop_footer
      %s17 = sadd.s32 1, %s13
    $region7: #{tpu_custom_call.1} parent=1 // loop_footer_branch
      %12 = sbr.rel target = $region3
    $region8: #{tpu_custom_call.1} parent=1 // loop_exit
      _
    %703 = vsyncpa [#allocation3], 1
    %s704 = scalar_lea.sflag [#allocation3], 1
    %705 = vsyncpa %s704, 1

// kernel: tpu_custom_call.1
$region0: #{tpu_custom_call.1}
  #allocation0 [shape = 'u32[]', space=smem, size = 0x4, offset = 0x4, fixed_abs, tag = 'smem constant byte address 0x4 - core index']
  #allocation1 [shape = 'u32[72,128]{1,0:T(1,128)}', space=vmem, size = 0x9000, scoped, tag = 'internal scratch']
  %s0 = inlined_call_operand.vmem [shape: bf16[2,9,9,16], index: 0, kind: input, shape index: {}]
  %s1 = inlined_call_operand.vmem [shape: bf16[2,9,9,16], index: 1, kind: input, shape index: {}]
  %s2 = inlined_call_operand.vmem [shape: bf16[64,8], index: 2, kind: input, shape index: {}]
  %s3 = inlined_call_operand.vmem [shape: f32[1,8], index: 3, kind: input, shape index: {}]
  %s4 = inlined_call_operand.hbm [shape: bf16[2,8,8,8], index: 4, kind: output, shape index: {}]
  %s5 = sld [smem:[#allocation0]]
  $region49: #{tpu_custom_call.1} parent=0
    _
  %s7 = ssub.s32 1, %s5
  %s8 = scalar_select 0, %s7, %s5
  $region1: #{tpu_custom_call.1} parent=0
    #allocation2 [shape = 'u8[32768]{0}', space=vmem, size = 0x8000, scoped, tag = 'output window, operand 0']
    #allocation3 [shape = 's32[2]{0}', space=sflag, size = 0x8, scoped, tag = 'scoped memory for tpu_custom_call.1']
    %9 = vsyncpa [#allocation3], 0
    %s10 = scalar_lea.sflag [#allocation3], 1
    %11 = vsyncpa %s10, 0
    loop: start=0, step=1, limit=4
    $region2: #{tpu_custom_call.1} parent=1 // loop_pre_header
      _
    $region3: #{tpu_custom_call.1} parent=1 // loop_header
      %s13 = sphi 0, %s17
      %p14 = scmp.ge.s32.totalorder %s13, 4
      %s20 = sphi 0, %s32
      %s21 = sphi 0, %s28
      %s22 = sphi 0, %s20
      %s23 = sphi 0, %s21
      %s24 = sphi 0, %s22
      %s25 = sphi 0, %s23
      %s37 = sphi 0, %s39
      %s40 = sphi 0, %s37
      %s41 = sphi 0, %s40
      %s57 = sphi 0, %s41
      %s69 = sphi 0, %s71
      %s72 = sphi 0, %s69
      %s73 = sphi 0, %s72
      %s89 = sphi 0, %s73
      %s93 = sphi 0, %s93
      %s95 = sphi 0, %s93
      %s96 = sphi 0, %s95
      %s110 = sphi 0, %s96
      %s114 = sphi 0, %s114
      %s116 = sphi 0, %s114
      %s117 = sphi 0, %s116
      %s131 = sphi 0, %s117
      %s139 = sphi 0, %s141
      %s142 = sphi 0, %s139
      %s143 = sphi 0, %s142
      %s159 = sphi 0, %s143
    $region4: #{tpu_custom_call.1} parent=1 // loop_header_branch
      %16 = sbr.rel (%p14) target = $region8
    $region5: #{tpu_custom_call.1} parent=1 // loop_body
      %s18 = ssub.s32 %s13, 1
      %s19 = ssub.s32 %s13, 2
      %s26 = sadd.s32 1, %s21
      %p27 = scmp.ge.s32.totalorder %s26, 1
      %s28 = scalar_select %p27, 0, %s26
      %s29 = sadd.s32 1, %s20
      %s30 = scalar_select %p27, %s29, %s20
      %p31 = scmp.ge.s32.totalorder %s30, 2
      %s32 = scalar_select %p31, 0, %s30
      %s33 = ssub.s32 %s20, %s32
      %s34 = ssub.s32 %s21, %s28
      %s35 = sor.u32 %s33, %s34
      %p36 = scmp.eq.s32.totalorder %s35, 0
      %s38 = sadd.s32 %s37, 1
      %s39 = scalar_select %p36, %s37, %s38
      %p42 = pneg %p36
      %p43 = scmp.eq.s32.totalorder %s13, 1
      %p44 = por %p42, %p43
      %p45 = scmp.ne.s32.totalorder %s37, %s40
      %p46 = scmp.eq.s32.totalorder %s13, 0
      %p47 = por %p45, %p46
      %p48 = scmp.ne.s32.totalorder %s37, %s40
      %p49 = scmp.eq.s32.totalorder %s18, 1
      %p50 = por %p48, %p49
      %p51 = scmp.ne.s32.totalorder %s40, %s41
      %p52 = scmp.eq.s32.totalorder %s18, 0
      %p53 = por %p51, %p52
      %p54 = scmp.ne.s32.totalorder %s40, %s41
      %p55 = scmp.eq.s32.totalorder %s19, 1
      %p56 = por %p54, %p55
      %p58 = scmp.ne.s32.totalorder %s41, %s57
      %p59 = scmp.eq.s32.totalorder %s19, 0
      %p60 = por %p58, %p59
      %s61 = sadd.s32 %s21, 1
      %s62 = smul.u32 %s61, 8
      %s63 = sadd.s32 %s28, 1
      %s64 = smul.u32 %s63, 8
      %s65 = ssub.s32 %s20, %s32
      %s66 = ssub.s32 %s62, %s64
      %s67 = sor.u32 %s65, %s66
      %p68 = scmp.eq.s32.totalorder %s67, 0
      %s70 = sadd.s32 %s69, 1
      %s71 = scalar_select %p68, %s69, %s70
      %p74 = pneg %p68
      %p75 = scmp.eq.s32.totalorder %s13, 1
      %p76 = por %p74, %p75
      %p77 = scmp.ne.s32.totalorder %s69, %s72
      %p78 = scmp.eq.s32.totalorder %s13, 0
      %p79 = por %p77, %p78
      %p80 = scmp.ne.s32.totalorder %s69, %s72
      %p81 = scmp.eq.s32.totalorder %s18, 1
      %p82 = por %p80, %p81
      %p83 = scmp.ne.s32.totalorder %s72, %s73
      %p84 = scmp.eq.s32.totalorder %s18, 0
      %p85 = por %p83, %p84
      %p86 = scmp.ne.s32.totalorder %s72, %s73
      %p87 = scmp.eq.s32.totalorder %s19, 1
      %p88 = por %p86, %p87
      %p90 = scmp.ne.s32.totalorder %s73, %s89
      %p91 = scmp.eq.s32.totalorder %s19, 0
      %p92 = por %p90, %p91
      %s94 = sadd.s32 %s93, 1
      %p97 = scmp.eq.s32.totalorder %s13, 1
      %p98 = scmp.ne.s32.totalorder %s93, %s95
      %p99 = scmp.eq.s32.totalorder %s13, 0
      %p100 = por %p98, %p99
      %p101 = scmp.ne.s32.totalorder %s93, %s95
      %p102 = scmp.eq.s32.totalorder %s18, 1
      %p103 = por %p101, %p102
      %p104 = scmp.ne.s32.totalorder %s95, %s96
      %p105 = scmp.eq.s32.totalorder %s18, 0
      %p106 = por %p104, %p105
      %p107 = scmp.ne.s32.totalorder %s95, %s96
      %p108 = scmp.eq.s32.totalorder %s19, 1
      %p109 = por %p107, %p108
      %p111 = scmp.ne.s32.totalorder %s96, %s110
      %p112 = scmp.eq.s32.totalorder %s19, 0
      %p113 = por %p111, %p112
      %s115 = sadd.s32 %s114, 1
      %p118 = scmp.eq.s32.totalorder %s13, 1
      %p119 = scmp.ne.s32.totalorder %s114, %s116
      %p120 = scmp.eq.s32.totalorder %s13, 0
      %p121 = por %p119, %p120
      %p122 = scmp.ne.s32.totalorder %s114, %s116
      %p123 = scmp.eq.s32.totalorder %s18, 1
      %p124 = por %p122, %p123
      %p125 = scmp.ne.s32.totalorder %s116, %s117
      %p126 = scmp.eq.s32.totalorder %s18, 0
      %p127 = por %p125, %p126
      %p128 = scmp.ne.s32.totalorder %s116, %s117
      %p129 = scmp.eq.s32.totalorder %s19, 1
      %p130 = por %p128, %p129
      %p132 = scmp.ne.s32.totalorder %s117, %s131
      %p133 = scmp.eq.s32.totalorder %s19, 0
      %p134 = por %p132, %p133
      %s135 = ssub.s32 %s20, %s32
      %s136 = ssub.s32 %s21, %s28
      %s137 = sor.u32 %s135, %s136
      %p138 = scmp.eq.s32.totalorder %s137, 0
      %s140 = sadd.s32 %s139, 1
      %s141 = scalar_select %p138, %s139, %s140
      %p144 = pneg %p138
      %p145 = scmp.eq.s32.totalorder %s13, 1
      %p146 = por %p144, %p145
      %p147 = scmp.ne.s32.totalorder %s139, %s142
      %p148 = scmp.eq.s32.totalorder %s13, 0
      %p149 = por %p147, %p148
      %p150 = scmp.ne.s32.totalorder %s139, %s142
      %p151 = scmp.eq.s32.totalorder %s18, 1
      %p152 = por %p150, %p151
      %p153 = scmp.ne.s32.totalorder %s142, %s143
      %p154 = scmp.eq.s32.totalorder %s18, 0
      %p155 = por %p153, %p154
      %p156 = scmp.ne.s32.totalorder %s142, %s143
      %p157 = scmp.eq.s32.totalorder %s19, 1
      %p158 = por %p156, %p157
      %p160 = scmp.ne.s32.totalorder %s143, %s159
      %p161 = scmp.eq.s32.totalorder %s19, 0
      %p162 = por %p160, %p161
      %p163 = scmp.le.s32.totalorder 1, %s13
      %p164 = scmp.lt.s32.totalorder %s13, 3
      %p165 = pnand %p163, %p164
      %p166 = pneg %p165
      // Predicated region
      $region9: #{tpu_custom_call.1} parent=5 // pred_check
        _
      $region10: #{tpu_custom_call.1} parent=5 // pred_check_branch
        %168 = sbr.rel (%p165) target = $region12
      $region11: #{tpu_custom_call.1} parent=5 // pred_region
        %s169 = ssub.s32 %s13, 1
        // Predicated region
        $region13: #{tpu_custom_call.1} parent=11 // pred_check
          %p170 = pneg %p106
        $region14: #{tpu_custom_call.1} parent=11 // pred_check_branch
          %172 = sbr.rel (%p170) target = $region16
        $region15: #{tpu_custom_call.1} parent=11 // pred_region
          _
        $region16: #{tpu_custom_call.1} parent=11 // pred_fallthru
          _
        // Predicated region
        $region17: #{tpu_custom_call.1} parent=11 // pred_check
          %p173 = pneg %p127
        $region18: #{tpu_custom_call.1} parent=11 // pred_check_branch
          %175 = sbr.rel (%p173) target = $region20
        $region19: #{tpu_custom_call.1} parent=11 // pred_region
          _
        $region20: #{tpu_custom_call.1} parent=11 // pred_fallthru
          _
      $region12: #{tpu_custom_call.1} parent=5 // pred_fallthru
        _
      %p176 = scmp.lt.s32.totalorder %s13, 2
      // Predicated region
      $region21: #{tpu_custom_call.1} parent=5 // pred_check
        %p177 = pneg %p176
      $region22: #{tpu_custom_call.1} parent=5 // pred_check_branch
        %179 = sbr.rel (%p177) target = $region24
      $region23: #{tpu_custom_call.1} parent=5 // pred_region
        // Predicated region
        $region25: #{tpu_custom_call.1} parent=23 // pred_check
          %p180 = pneg %p47
        $region26: #{tpu_custom_call.1} parent=23 // pred_check_branch
          %182 = sbr.rel (%p180) target = $region28
        $region27: #{tpu_custom_call.1} parent=23 // pred_region
          %s183 = smul.u32 8, %s21
          %s184 = ssub.s32 9, %s183
          %p185 = scmp.lt.s32.totalorder %s184, 8
          %s186 = scalar_select %p185, %s184, 8
          %s187 = smul.u32 4, %s186
          %s188 = smul.u32 %s187, 2
          %p189 = scmp.lt.s32.totalorder %s20, 1
          %s190 = scalar_select %p189, %s20, 1
          %p191 = scmp.lt.s32.totalorder %s183, 8
          %s192 = scalar_select %p191, %s183, 8
          %s193 = smul.addr %s192, 2
          %s194 = smul.addr %s190, 18
          %s195 = sadd.s32 %s193, %s194
          %s196 = smul.addr %s195, 4
          %s197 = scalar_lea.vmem %s0, %s196
          %s198 = smul.u32 8, %s21
          %s199 = ssub.s32 9, %s198
          %p200 = scmp.lt.s32.totalorder %s199, 8
          %s201 = scalar_select %p200, %s199, 8
          %s202 = smul.u32 4, %s201
          %s203 = smul.u32 %s202, 2
        $region28: #{tpu_custom_call.1} parent=23 // pred_fallthru
          _
        // Predicated region
        $region29: #{tpu_custom_call.1} parent=23 // pred_check
          %p204 = pneg %p79
        $region30: #{tpu_custom_call.1} parent=23 // pred_check_branch
          %206 = sbr.rel (%p204) target = $region32
        $region31: #{tpu_custom_call.1} parent=23 // pred_region
          %s207 = sadd.s32 %s21, 1
          %s208 = smul.u32 %s207, 8
          %p209 = scmp.lt.s32.totalorder %s20, 1
          %s210 = scalar_select %p209, %s20, 1
          %p211 = scmp.lt.s32.totalorder %s208, 8
          %s212 = scalar_select %p211, %s208, 8
          %s213 = smul.addr %s212, 2
          %s214 = smul.addr %s210, 18
          %s215 = sadd.s32 %s213, %s214
          %s216 = smul.addr %s215, 4
          %s217 = scalar_lea.vmem %s1, %s216
          %s218 = sadd.s32 %s21, 1
          %s219 = smul.u32 %s218, 8
        $region32: #{tpu_custom_call.1} parent=23 // pred_fallthru
          _
      $region24: #{tpu_custom_call.1} parent=5 // pred_fallthru
        _
      %p220 = scmp.le.s32.totalorder 1, %s13
      %p221 = scmp.lt.s32.totalorder %s13, 3
      %p222 = pnand %p220, %p221
      %p223 = pneg %p222
      // Predicated region
      $region33: #{tpu_custom_call.1} parent=5 // pred_check
        _
      $region34: #{tpu_custom_call.1} parent=5 // pred_check_branch
        %225 = sbr.rel (%p222) target = $region36
      $region35: #{tpu_custom_call.1} parent=5 // pred_region
        %s226 = ssub.s32 %s13, 1
        %s227 = smul.u32 8, %s23
        %s228 = ssub.s32 9, %s227
        %p229 = scmp.lt.s32.totalorder %s228, 8
        %s230 = scalar_select %p229, %s228, 8
        %s231 = smul.u32 4, %s230
        %s232 = smul.u32 %s231, 2
        %p233 = scmp.lt.s32.totalorder %s22, 1
        %s234 = scalar_select %p233, %s22, 1
        %p235 = scmp.lt.s32.totalorder %s227, 8
        %s236 = scalar_select %p235, %s227, 8
        %s237 = smul.addr %s236, 2
        %s238 = smul.addr %s234, 18
        %s239 = sadd.s32 %s237, %s238
        %s240 = smul.addr %s239, 4
        %s241 = scalar_lea.vmem %s0, %s240
        %p242 = pneg %p53
        %p243 = pneg %p50
        %s244 = sadd.s32 %s23, 1
        %s245 = smul.u32 %s244, 8
        %p246 = scmp.lt.s32.totalorder %s22, 1
        %s247 = scalar_select %p246, %s22, 1
        %p248 = scmp.lt.s32.totalorder %s245, 8
        %s249 = scalar_select %p248, %s245, 8
        %s250 = smul.addr %s249, 2
        %s251 = smul.addr %s247, 18
        %s252 = sadd.s32 %s250, %s251
        %s253 = smul.addr %s252, 4
        %s254 = scalar_lea.vmem %s1, %s253
        %p255 = pneg %p85
        %p256 = pneg %p82
        %p257 = pneg %p106
        %p258 = pneg %p103
        %p259 = pneg %p127
        %p260 = pneg %p124
        %p261 = pneg %p155
        %p262 = pneg %p152
        %s263 = sand.u32 %s142, 1
        %s264 = scalar_lea.sflag [#allocation3], %s263
        %s265 = sand.u32 %s142, 1
        %s266 = smul.addr %s265, 32
        %s267 = scalar_lea.vmem [#allocation2], %s266
        %s268 = smul.u32 8, %s23
        %s269 = ssub.s32 9, %s268
        %p270 = scmp.lt.s32.totalorder %s269, 8
        %s271 = scalar_select %p270, %s269, 8
        %s272 = smul.u32 4, %s271
        %s273 = smul.u32 %s272, 2
        %p274 = scmp.lt.s32.totalorder %s22, 1
        %s275 = scalar_select %p274, %s22, 1
        %p276 = scmp.lt.s32.totalorder %s268, 8
        %s277 = scalar_select %p276, %s268, 8
        %s278 = smul.addr %s277, 2
        %s279 = smul.addr %s275, 18
        %s280 = sadd.s32 %s278, %s279
        %s281 = smul.addr %s280, 4
        %s282 = scalar_lea.vmem %s0, %s281
        %s283 = smul.u32 8, %s23
        %s284 = ssub.s32 9, %s283
        %p285 = scmp.lt.s32.totalorder %s284, 8
        %s286 = scalar_select %p285, %s284, 8
        %s287 = smul.u32 4, %s286
        %s288 = smul.u32 %s287, 2
        %s289 = sadd.s32 %s23, 1
        %s290 = smul.u32 %s289, 8
        %p291 = scmp.lt.s32.totalorder %s22, 1
        %s292 = scalar_select %p291, %s22, 1
        %p293 = scmp.lt.s32.totalorder %s290, 8
        %s294 = scalar_select %p293, %s290, 8
        %s295 = smul.addr %s294, 2
        %s296 = smul.addr %s292, 18
        %s297 = sadd.s32 %s295, %s296
        %s298 = smul.addr %s297, 4
        %s299 = scalar_lea.vmem %s1, %s298
        %s300 = sadd.s32 %s23, 1
        %s301 = smul.u32 %s300, 8
        %s302 = smul.u32 8, %s23
        %v304 = vld [vmem:[%s282] sm:$0xf]
        %v305 = vld [vmem:[%s282 + $0x4] sm:$0x1]
        %v306 = vld [vmem:[%s282 + $0x8] sm:$0xf]
        %v307 = vld [vmem:[%s282 + $0xc] sm:$0x1]
        %v308 = vld [vmem:[%s282 + $0x10] sm:$0xf]
        %v309 = vld [vmem:[%s282 + $0x14] sm:$0x1]
        %v310 = vld [vmem:[%s282 + $0x18] sm:$0xf]
        %v311 = vld [vmem:[%s282 + $0x1c] sm:$0x1]
        %v312 = vld [vmem:[%s282 + $0x20] sm:$0xf]
        %v313 = vld [vmem:[%s282 + $0x24] sm:$0x1]
        %v314 = vld [vmem:[%s282 + $0x28] sm:$0xf]
        %v315 = vld [vmem:[%s282 + $0x2c] sm:$0x1]
        %v316 = vld [vmem:[%s282 + $0x30] sm:$0xf]
        %v317 = vld [vmem:[%s282 + $0x34] sm:$0x1]
        %v318 = vld [vmem:[%s282 + $0x38] sm:$0xf]
        %v319 = vld [vmem:[%s282 + $0x3c] sm:$0x1]
        %v320 = vld [vmem:[%s299] sm:$0xf]
        %v321 = vld [vmem:[%s299 + $0x4] sm:$0x1]
        %vm322 = vsmask.f32 3328
        %vm323 = vsmask.f32 7440
        %vm324 = vmor %vm322, %vm323
        %v326 = vshrl.u32 %v304, 16
        %v328 = vrot.slane %v326, 4
        %v329 = vshll.u32 %v304, 16
        %v331 = vrot.slane %v329, 5
        %v332 = vor.u32 %v328, %v331
        %v333 = vrot.slane %v332, 4
        %v335 = vshll.u32 %v305, 16
        %v337 = vrot.slane %v335, 5
        %v338 = vsel %vm324, %v333, %v337
        %v340 = vshrl.u32 %v306, 16
        %v342 = vrot.slane %v340, 4
        %v343 = vshll.u32 %v306, 16
        %v345 = vrot.slane %v343, 5
        %v346 = vor.u32 %v342, %v345
        %v347 = vrot.slane %v346, 4
        %v349 = vshll.u32 %v307, 16
        %v351 = vrot.slane %v349, 5
        %v352 = vsel %vm324, %v347, %v351
        %v354 = vshrl.u32 %v308, 16
        %v356 = vrot.slane %v354, 4
        %v357 = vshll.u32 %v308, 16
        %v359 = vrot.slane %v357, 5
        %v360 = vor.u32 %v356, %v359
        %v361 = vrot.slane %v360, 4
        %v363 = vshll.u32 %v309, 16
        %v365 = vrot.slane %v363, 5
        %v366 = vsel %vm324, %v361, %v365
        %v368 = vshrl.u32 %v310, 16
        %v370 = vrot.slane %v368, 4
        %v371 = vshll.u32 %v310, 16
        %v373 = vrot.slane %v371, 5
        %v374 = vor.u32 %v370, %v373
        %v375 = vrot.slane %v374, 4
        %v377 = vshll.u32 %v311, 16
        %v379 = vrot.slane %v377, 5
        %v380 = vsel %vm324, %v375, %v379
        %v382 = vshrl.u32 %v312, 16
        %v384 = vrot.slane %v382, 4
        %v385 = vshll.u32 %v312, 16
        %v387 = vrot.slane %v385, 5
        %v388 = vor.u32 %v384, %v387
        %v389 = vrot.slane %v388, 4
        %v391 = vshll.u32 %v313, 16
        %v393 = vrot.slane %v391, 5
        %v394 = vsel %vm324, %v389, %v393
        %v396 = vshrl.u32 %v314, 16
        %v398 = vrot.slane %v396, 4
        %v399 = vshll.u32 %v314, 16
        %v401 = vrot.slane %v399, 5
        %v402 = vor.u32 %v398, %v401
        %v403 = vrot.slane %v402, 4
        %v405 = vshll.u32 %v315, 16
        %v407 = vrot.slane %v405, 5
        %v408 = vsel %vm324, %v403, %v407
        %v410 = vshrl.u32 %v316, 16
        %v412 = vrot.slane %v410, 4
        %v413 = vshll.u32 %v316, 16
        %v415 = vrot.slane %v413, 5
        %v416 = vor.u32 %v412, %v415
        %v417 = vrot.slane %v416, 4
        %v419 = vshll.u32 %v317, 16
        %v421 = vrot.slane %v419, 5
        %v422 = vsel %vm324, %v417, %v421
        %v424 = vshrl.u32 %v318, 16
        %v426 = vrot.slane %v424, 4
        %v427 = vshll.u32 %v318, 16
        %v429 = vrot.slane %v427, 5
        %v430 = vor.u32 %v426, %v429
        %v431 = vrot.slane %v430, 4
        %v433 = vshll.u32 %v319, 16
        %v435 = vrot.slane %v433, 5
        %v436 = vsel %vm324, %v431, %v435
        %v438 = vshrl.u32 %v320, 16
        %v440 = vrot.slane %v438, 4
        %v441 = vshll.u32 %v320, 16
        %v443 = vrot.slane %v441, 5
        %v444 = vor.u32 %v440, %v443
        %v445 = vrot.slane %v444, 4
        %v447 = vshll.u32 %v321, 16
        %v449 = vrot.slane %v447, 5
        %v450 = vsel %vm324, %v445, %v449
        %v459 = vunpack.c.l.b16 %v304
        %v460 = vunpack.c.l.b16 %v306
        %v461 = vunpack.c.l.b16 %v308
        %v462 = vunpack.c.l.b16 %v310
        %v463 = vunpack.c.l.b16 %v312
        %v464 = vunpack.c.l.b16 %v314
        %v465 = vunpack.c.l.b16 %v316
        %v466 = vunpack.c.l.b16 %v318
        %v467 = vpack.c.b16 %v460, %v459
        %v468 = vpack.c.b16 %v462, %v461
        %v469 = vpack.c.b16 %v464, %v463
        %v470 = vpack.c.b16 %v466, %v465
        %v471 = vunpack.c.l.b16 %v338
        %v472 = vunpack.c.l.b16 %v352
        %v473 = vunpack.c.l.b16 %v366
        %v474 = vunpack.c.l.b16 %v380
        %v475 = vunpack.c.l.b16 %v394
        %v476 = vunpack.c.l.b16 %v408
        %v477 = vunpack.c.l.b16 %v422
        %v478 = vunpack.c.l.b16 %v436
        %v479 = vpack.c.b16 %v472, %v471
        %v480 = vpack.c.b16 %v474, %v473
        %v481 = vpack.c.b16 %v476, %v475
        %v482 = vpack.c.b16 %v478, %v477
        %483 = vrot.lane.b32.xlu0 %v479, 16
        %v484 = vpop.permute.xlu0 %483
        %485 = vrot.lane.b32.xlu0 %v480, 16
        %v486 = vpop.permute.xlu0 %485
        %487 = vrot.lane.b32.xlu0 %v481, 16
        %v488 = vpop.permute.xlu0 %487
        %489 = vrot.lane.b32.xlu0 %v482, 16
        %v490 = vpop.permute.xlu0 %489
        %v492 = vunpack.c.l.b16 %v320
        %v493 = vpack.c.b16 %v461, %v460
        %v494 = vpack.c.b16 %v463, %v462
        %v495 = vpack.c.b16 %v465, %v464
        %v496 = vpack.c.b16 %v492, %v466
        %497 = vrot.lane.b32.xlu0 %v493, 32
        %v498 = vpop.permute.xlu0 %497
        %499 = vrot.lane.b32.xlu0 %v494, 32
        %v500 = vpop.permute.xlu0 %499
        %501 = vrot.lane.b32.xlu0 %v495, 32
        %v502 = vpop.permute.xlu0 %501
        %503 = vrot.lane.b32.xlu0 %v496, 32
        %v504 = vpop.permute.xlu0 %503
        %v505 = vunpack.c.l.b16 %v450
        %v506 = vpack.c.b16 %v473, %v472
        %v507 = vpack.c.b16 %v475, %v474
        %v508 = vpack.c.b16 %v477, %v476
        %v509 = vpack.c.b16 %v505, %v478
        %510 = vrot.lane.b32.xlu0 %v506, 48
        %v511 = vpop.permute.xlu0 %510
        %512 = vrot.lane.b32.xlu0 %v507, 48
        %v513 = vpop.permute.xlu0 %512
        %514 = vrot.lane.b32.xlu0 %v508, 48
        %v515 = vpop.permute.xlu0 %514
        %516 = vrot.lane.b32.xlu0 %v509, 48
        %v517 = vpop.permute.xlu0 %516
        %vm518 = vcmask 130048
        %v521 = vsel %vm518, %v467, %v484
        %v524 = vsel %vm518, %v468, %v486
        %v527 = vsel %vm518, %v469, %v488
        %v530 = vsel %vm518, %v470, %v490
        %vm531 = vcmask 261120
        %v533 = vsel %vm531, %v521, %v498
        %v535 = vsel %vm531, %v524, %v500
        %v537 = vsel %vm531, %v527, %v502
        %v539 = vsel %vm531, %v530, %v504
        %vm540 = vcmask 392192
        %v542 = vsel %vm540, %v533, %v511
        %v544 = vsel %vm540, %v535, %v513
        %v546 = vsel %vm540, %v537, %v515
        %v548 = vsel %vm540, %v539, %v517
        %v549 = vld [vmem:[%s2] sm:$0xf]
        %v550 = vld [vmem:[%s2 + $0x4] sm:$0xf]
        %v551 = vld [vmem:[%s2 + $0x8] sm:$0xf]
        %v552 = vld [vmem:[%s2 + $0xc] sm:$0xf]
        %v553 = vld [vmem:[%s2 + $0x10] sm:$0xf]
        %v554 = vld [vmem:[%s2 + $0x14] sm:$0xf]
        %v555 = vld [vmem:[%s2 + $0x18] sm:$0xf]
        %v556 = vld [vmem:[%s2 + $0x1c] sm:$0xf]
        %v557 = vld [vmem:[%s3] sm:$0x1]
        %v559 = vperm.slane %v557, 0
        %v569 = vunpack.c.l.b16 %v549
        %v570 = vunpack.c.l.b16 %v550
        %v571 = vunpack.c.l.b16 %v551
        %v572 = vunpack.c.l.b16 %v552
        %v573 = vunpack.c.l.b16 %v553
        %v574 = vunpack.c.l.b16 %v554
        %v575 = vunpack.c.l.b16 %v555
        %v576 = vunpack.c.l.b16 %v556
        %v577 = vpack.c.b16 %v570, %v569
        %v578 = vpack.c.b16 %v572, %v571
        %v579 = vpack.c.b16 %v574, %v573
        %v580 = vpack.c.b16 %v576, %v575
        %vm585 = vcmask 523264
        %v586 = vsel %vm585, %v542, 0
        %v588 = vsel %vm585, %v544, 0
        %v590 = vsel %vm585, %v546, 0
        %v592 = vsel %vm585, %v548, 0
        %594 = vmatpush.bf16.msra.mxu0 0
        %595 = vmatpush.bf16.msra.mxu0 0
        %596 = vmatpush.bf16.msra.mxu0 0
        %597 = vmatpush.bf16.msra.mxu0 0
        %598 = vmatpush.bf16.msra.mxu0 %v580
        %599 = vmatpush.bf16.msra.mxu0 %v579
        %600 = vmatpush.bf16.msra.mxu0 %v578
        %601 = vmatpush.bf16.msra.mxu0 %v577
        %602 = vmatmul.bf16.gmra.mxu0 %v586
        %v603 = vpop.f32.mrf.mxu0
        %v604 = vadd.f32 %v559, %v603
        %v605 = vpop.f32.mrf.mxu0
        %v606 = vadd.f32 %v559, %v605
        %607 = vmatmul.bf16.gmra.mxu0 %v588
        %v608 = vpop.f32.mrf.mxu0
        %v609 = vadd.f32 %v559, %v608
        %v610 = vpop.f32.mrf.mxu0
        %v611 = vadd.f32 %v559, %v610
        %612 = vmatmul.bf16.gmra.mxu0 %v590
        %v613 = vpop.f32.mrf.mxu0
        %v614 = vadd.f32 %v559, %v613
        %v615 = vpop.f32.mrf.mxu0
        %v616 = vadd.f32 %v559, %v615
        %617 = vmatmul.bf16.gmra.mxu0 %v592
        %v618 = vpop.f32.mrf.mxu0
        %v619 = vadd.f32 %v559, %v618
        %v620 = vpop.f32.mrf.mxu0
        %v621 = vadd.f32 %v559, %v620
        %622 = vdwg.mxu0
        %vm623 = vcmp.ge.f32.partialorder %v604, 0.0
        %vm624 = vcmp.ge.f32.partialorder %v606, 0.0
        %vm625 = vcmp.ge.f32.partialorder %v609, 0.0
        %vm626 = vcmp.ge.f32.partialorder %v611, 0.0
        %vm627 = vcmp.ge.f32.partialorder %v614, 0.0
        %vm628 = vcmp.ge.f32.partialorder %v616, 0.0
        %vm629 = vcmp.ge.f32.partialorder %v619, 0.0
        %vm630 = vcmp.ge.f32.partialorder %v621, 0.0
        %v631 = vmul.f32 %v604, 0.2
        %v632 = vmul.f32 %v606, 0.2
        %v633 = vmul.f32 %v609, 0.2
        %v634 = vmul.f32 %v611, 0.2
        %v635 = vmul.f32 %v614, 0.2
        %v636 = vmul.f32 %v616, 0.2
        %v637 = vmul.f32 %v619, 0.2
        %v638 = vmul.f32 %v621, 0.2
        %v639 = vsel %vm623, %v604, %v631
        %v640 = vsel %vm624, %v606, %v632
        %v641 = vsel %vm625, %v609, %v633
        %v642 = vsel %vm626, %v611, %v634
        %v643 = vsel %vm627, %v614, %v635
        %v644 = vsel %vm628, %v616, %v636
        %v645 = vsel %vm629, %v619, %v637
        %v646 = vsel %vm630, %v621, %v638
        %v647 = vpack.c.bf16 %v639, %v639
        %v648 = vpack.c.bf16 %v640, %v640
        %v649 = vpack.c.bf16 %v641, %v641
        %v650 = vpack.c.bf16 %v642, %v642
        %v651 = vpack.c.bf16 %v643, %v643
        %v652 = vpack.c.bf16 %v644, %v644
        %v653 = vpack.c.bf16 %v645, %v645
        %v654 = vpack.c.bf16 %v646, %v646
        %vm655 = vcmask 60416
        %656 = vst.msk [vmem:[%s267] sm:$0xf] %vm655, %v647
        %657 = vst.msk [vmem:[%s267 + $0x4] sm:$0xf] %vm655, %v648
        %658 = vst.msk [vmem:[%s267 + $0x8] sm:$0xf] %vm655, %v649
        %659 = vst.msk [vmem:[%s267 + $0xc] sm:$0xf] %vm655, %v650
        %660 = vst.msk [vmem:[%s267 + $0x10] sm:$0xf] %vm655, %v651
        %661 = vst.msk [vmem:[%s267 + $0x14] sm:$0xf] %vm655, %v652
        %662 = vst.msk [vmem:[%s267 + $0x18] sm:$0xf] %vm655, %v653
        %663 = vst.msk [vmem:[%s267 + $0x1c] sm:$0xf] %vm655, %v654
        %s664 = sand.u32 %s142, 1
        %s665 = scalar_lea.sflag [#allocation3], %s664
        %s666 = sand.u32 %s142, 1
        %s667 = smul.addr %s666, 32
        %s668 = scalar_lea.vmem [#allocation2], %s667
        // Predicated region
        $region37: #{tpu_custom_call.1} parent=35 // pred_check
          %p669 = pneg %p152
        $region38: #{tpu_custom_call.1} parent=35 // pred_check_branch
          %671 = sbr.rel (%p669) target = $region40
        $region39: #{tpu_custom_call.1} parent=35 // pred_region
          %s672 = smul.u32 8, %s23
          %674 = vsyncadd %s665, 0
          %s675 = smul.addr %s22, 8
          %s676 = sadd.s32 %s672, %s675
          %s677 = smul.addr %s676, 4
          %s678 = scalar_lea.hbm %s4, %s677
          %s679 = sshll.u32 %s668, 4
          %s680 = int_to_ptr.vmem [resolvable:$true] %s679
          %s681 = sshll.u32 %s678, 4
          %s682 = int_to_ptr.hbm [resolvable:$true] %s681
          %687 = dma.vmem_to_hbm [thread:$0]  %s680, 512, %s682, %s665, 64, 64, 4
        $region40: #{tpu_custom_call.1} parent=35 // pred_fallthru
          _
      $region36: #{tpu_custom_call.1} parent=5 // pred_fallthru
        _
      %p688 = scmp.le.s32.totalorder 2, %s13
      // Predicated region
      $region41: #{tpu_custom_call.1} parent=5 // pred_check
        %p689 = pneg %p688
      $region42: #{tpu_custom_call.1} parent=5 // pred_check_branch
        %691 = sbr.rel (%p689) target = $region44
      $region43: #{tpu_custom_call.1} parent=5 // pred_region
        %s692 = ssub.s32 %s13, 2
        // Predicated region
        $region45: #{tpu_custom_call.1} parent=43 // pred_check
          %p693 = pneg %p158
        $region46: #{tpu_custom_call.1} parent=43 // pred_check_branch
          %695 = sbr.rel (%p693) target = $region48
        $region47: #{tpu_custom_call.1} parent=43 // pred_region
          %s696 = sand.u32 %s143, 1
          %s697 = scalar_lea.sflag [#allocation3], %s696
          %s698 = sand.u32 %s143, 1
          %s699 = smul.addr %s698, 32
          %s700 = scalar_lea.vmem [#allocation2], %s699
          %702 = dma.done %s697, 512
        $region48: #{tpu_custom_call.1} parent=43 // pred_fallthru
          _
      $region44: #{tpu_custom_call.1} parent=5 // pred_fallthru
        _
    $region6: #{tpu_custom_call.1} parent=1 // loop_footer
      %s17 = sadd.s32 1, %s13
    $region7: #{tpu_custom_call.1} parent=1 // loop_footer_branch
      %12 = sbr.rel target = $region3
    $region8: #{tpu_custom_call.1} parent=1 // loop_exit
      _
    %703 = vsyncpa [#allocation3], 1
    %s704 = scalar_lea.sflag [#allocation3], 1
    %705 = vsyncpa %s704, 1

</llo_original>
